<compile_context>
chip_gen: v6e
topology: v6e:2x2x1
jax: 0.10.0
libtpu: 0.0.40
codegen_flags: <defaults>
</compile_context>

<pallas_src>
import functools

import jax
import jax.numpy as jnp
from jax.experimental import pallas as pl
from jax.experimental.pallas import tpu as pltpu


# ----------------------------------------------------------------------------
# small helpers
# ----------------------------------------------------------------------------
def _round_up(x, m):
    return (x + m - 1) // m * m


def _pad_to(a, target_shape):
    pads = [(0, t - s) for s, t in zip(a.shape, target_shape)]
    if all(p == (0, 0) for p in pads):
        return a
    return jnp.pad(a, pads)


def _zero_index_map(*_grid_idx, ndim):
    return (0,) * ndim


def _estimate_vmem(tm, e_pad, r_pad, h_pad, weight_bytes, in_bytes, out_bytes):
    # e/r/out row tiles are double-buffered by the pipeline; weights counted
    # twice to stay conservative even if single-buffering is unavailable;
    # plus a few f32 activation slabs for h / y.
    tiles = 2 * tm * ((e_pad + r_pad) * in_bytes + e_pad * out_bytes)
    acts = 4 * tm * max(h_pad, e_pad) * 4
    return tiles + 2 * weight_bytes + acts


# ----------------------------------------------------------------------------
# Kernel
# ----------------------------------------------------------------------------
def _beta_projection_kernel(num_layers, *refs):
    # refs = (e_ref, r_ref, w1_e, w1_r, b1, [w2, b2, ...], w0, b0, out_ref)
    e_ref, r_ref = refs[0], refs[1]
    out_ref = refs[-1]
    params = refs[2:-1]

    e = e_ref[0]                       # (tm, E_pad)
    r = r_ref[0]                       # (tm, R_pad)

    # layer1 split across the (former) concat boundary: x@W1 == e@W1_e + r@W1_r
    h = (jnp.dot(e, params[0][...], preferred_element_type=jnp.float32)
         + jnp.dot(r, params[1][...], preferred_element_type=jnp.float32)
         + params[2][...])
    h = jnp.maximum(h, 0.0)

    # hidden layers 2..num_layers (Linear + ReLU), statically unrolled
    idx = 3
    for _ in range(num_layers - 1):
        w = params[idx][...]
        b = params[idx + 1][...]
        idx += 2
        h = jnp.dot(h.astype(w.dtype), w, preferred_element_type=jnp.float32) + b
        h = jnp.maximum(h, 0.0)

    # layer0: hidden_dim -> entity_dim (no ReLU)
    w0 = params[-2][...]
    b0 = params[-1][...]
    y = jnp.dot(h.astype(w0.dtype), w0, preferred_element_type=jnp.float32) + b0

    # projection_regularizer: BetaE Regularizer(base_add=1, min=0.05, max=1e9)
    y = jnp.clip(y + 1.0, 0.05, 1e9)

    out_ref[0] = y.astype(out_ref.dtype)


def _pallas_forward(e3, r3, weight_args, *, grid, tm, e_pad, r_pad, num_layers,
                    e_bcast, r_bcast, out_b, out_rows, out_dtype, vmem_limit,
                    single_buffer_weights):
    # broadcast of the leading axis expressed purely via the index_map
    e_idx = (lambda b, i: (0, i, 0)) if e_bcast else (lambda b, i: (b, i, 0))
    r_idx = (lambda b, i: (0, i, 0)) if r_bcast else (lambda b, i: (b, i, 0))

    in_specs = [pl.BlockSpec((1, tm, e_pad), e_idx),
                pl.BlockSpec((1, tm, r_pad), r_idx)]

    w_kwargs = {}
    if single_buffer_weights:
        # weights never change across the grid -> one VMEM buffer is enough
        w_kwargs["pipeline_mode"] = pl.Buffered(1)
    for w in weight_args:
        in_specs.append(pl.BlockSpec(
            w.shape, functools.partial(_zero_index_map, ndim=w.ndim), **w_kwargs))

    out_spec = pl.BlockSpec((1, tm, e_pad), lambda b, i: (b, i, 0))

    return pl.pallas_call(
        functools.partial(_beta_projection_kernel, num_layers),
        out_shape=jax.ShapeDtypeStruct((out_b, out_rows, e_pad), out_dtype),
        grid_spec=pltpu.PrefetchScalarGridSpec(
            num_scalar_prefetch=0,
            grid=grid,
            in_specs=in_specs,
            out_specs=out_spec),
        compiler_params=pltpu.CompilerParams(
            dimension_semantics=("parallel", "parallel"),
            vmem_limit_bytes=vmem_limit),
    )(e3, r3, *weight_args)


# ----------------------------------------------------------------------------
# Wrapper
# ----------------------------------------------------------------------------
def beta_projection(e_embedding, r_embedding, params, *, entity_dim, num_layers,
                    tm=256):
    """params: dict with 'w1','b1',...,'w{num_layers}','b{num_layers}','w0','b0'.
    Weights stored as (in_dim, out_dim) so the kernel computes x @ W."""
    be, br = e_embedding.shape[0], r_embedding.shape[0]
    b_out = max(be, br)
    assert be in (1, b_out) and br in (1, b_out), "incompatible leading dims"
    assert e_embedding.shape[1] == r_embedding.shape[1], "row counts must match"
    assert e_embedding.shape[-1] == entity_dim
    n = e_embedding.shape[1]
    relation_dim = r_embedding.shape[-1]
    hidden_dim = params["w1"].shape[1]
    out_dtype = jnp.result_type(e_embedding.dtype, r_embedding.dtype)

    # --- lane-dense (multiple of 128) feature dims ---------------------------
    e_pad = _round_up(entity_dim, 128)
    r_pad = _round_up(relation_dim, 128)
    h_pad = _round_up(hidden_dim, 128)

    # --- pad & split weights (zero padding is exact; in production do once) --
    w1 = params["w1"]
    weight_args = [_pad_to(w1[:entity_dim], (e_pad, h_pad)),
                   _pad_to(w1[entity_dim:], (r_pad, h_pad)),
                   _pad_to(params["b1"], (1, h_pad))]
    for nl in range(2, num_layers + 1):
        weight_args.append(_pad_to(params[f"w{nl}"], (h_pad, h_pad)))
        weight_args.append(_pad_to(params[f"b{nl}"], (1, h_pad)))
    weight_args.append(_pad_to(params["w0"], (h_pad, e_pad)))
    weight_args.append(_pad_to(params["b0"], (1, e_pad)))
    weight_bytes = sum(int(w.size) * w.dtype.itemsize for w in weight_args)

    # --- row tile: as large as fits a conservative VMEM budget ---------------
    in_bytes = e_embedding.dtype.itemsize
    out_bytes = jnp.dtype(out_dtype).itemsize
    tm_eff = max(8, min(_round_up(tm, 8), _round_up(n, 8)))
    budget = 48 * 1024 * 1024          # headroom under v7x's 64 MiB/TC VMEM
    while tm_eff > 8 and _estimate_vmem(tm_eff, e_pad, r_pad, h_pad,
                                        weight_bytes, in_bytes, out_bytes) > budget:
        tm_eff = max(8, ((tm_eff // 2) // 8) * 8)
    n_pad = _round_up(n, tm_eff)

    vmem_limit = int(min(64 * 1024 * 1024,
                         max(32 * 1024 * 1024,
                             2 * _estimate_vmem(tm_eff, e_pad, r_pad, h_pad,
                                                weight_bytes, in_bytes, out_bytes))))

    # --- pad rows + features of the activations (remainder handling) ---------
    e3 = _pad_to(e_embedding, (be, n_pad, e_pad))
    r3 = _pad_to(r_embedding, (br, n_pad, r_pad))

    call = functools.partial(
        _pallas_forward, e3, r3, weight_args,
        grid=(b_out, n_pad // tm_eff), tm=tm_eff, e_pad=e_pad, r_pad=r_pad,
        num_layers=num_layers,
        e_bcast=(be == 1 and b_out > 1), r_bcast=(br == 1 and b_out > 1),
        out_b=b_out, out_rows=n_pad, out_dtype=out_dtype, vmem_limit=vmem_limit)
    try:
        out = call(single_buffer_weights=True)
    except Exception:
        # Fallback if this JAX build rejects pl.Buffered(1) single-buffering;
        # only costs extra VMEM for the (fully resident) weights.
        out = call(single_buffer_weights=False)

    return out[:, :n, :entity_dim]


# ----------------------------------------------------------------------------
# Deterministic parameter init (xavier_uniform on weights, like the module)
# ----------------------------------------------------------------------------
def init_params(key, entity_dim, relation_dim, hidden_dim, num_layers):
    params = {}

    def xavier(key, fan_in, fan_out):
        bound = jnp.sqrt(6.0 / (fan_in + fan_out))
        return jax.random.uniform(key, (fan_in, fan_out), jnp.float32,
                                  minval=-bound, maxval=bound)

    def bias(key, fan_in, fan_out):
        bound = 1.0 / jnp.sqrt(fan_in)
        return jax.random.uniform(key, (1, fan_out), jnp.float32,
                                  minval=-bound, maxval=bound)

    dims = {1: (entity_dim + relation_dim, hidden_dim)}
    for nl in range(2, num_layers + 1):
        dims[nl] = (hidden_dim, hidden_dim)
    dims[0] = (hidden_dim, entity_dim)

    for nl, (fi, fo) in dims.items():
        key, kw, kb = jax.random.split(key, 3)
        params[f"w{nl}"] = xavier(kw, fi, fo)
        params[f"b{nl}"] = bias(kb, fi, fo)
    return params


# ----------------------------------------------------------------------------
# Pure-JAX reference (in-script sanity check)
# ----------------------------------------------------------------------------
def beta_projection_ref(e, r, params, *, num_layers):
    if r.shape[0] == 2 and e.shape[0] == 1:
        e = jnp.broadcast_to(e, (2,) + e.shape[1:])
    if r.shape[0] == 1 and e.shape[0] == 2:
        r = jnp.broadcast_to(r, (2,) + r.shape[1:])
    x = jnp.concatenate([e, r], axis=-1)
    for nl in range(1, num_layers + 1):
        x = jax.nn.relu(x @ params[f"w{nl}"] + params[f"b{nl}"][0])
    x = x @ params["w0"] + params["b0"][0]
    return jnp.clip(x + 1.0, 0.05, 1e9)


if __name__ == "__main__":
    entity_dim, relation_dim, hidden_dim, num_layers = 32, 32, 64, 2

    key = jax.random.PRNGKey(0)
    kp, ke, kr, ke2, kr2 = jax.random.split(key, 5)
    params = init_params(kp, entity_dim, relation_dim, hidden_dim, num_layers)

    # case 1: e leading dim 1, r leading dim 2 -> exercises the expand branch
    e1 = jax.random.normal(ke, (1, 8, entity_dim), jnp.float32)
    r1 = jax.random.normal(kr, (2, 8, relation_dim), jnp.float32)
    out1 = jax.block_until_ready(
        beta_projection(e1, r1, params, entity_dim=entity_dim, num_layers=num_layers))
    ref1 = beta_projection_ref(e1, r1, params, num_layers=num_layers)
    assert out1.shape == (2, 8, entity_dim)
    assert jnp.allclose(out1, ref1, atol=1e-4, rtol=1e-4)

    # case 2: larger, non-multiple row count + the other expand branch ->
    # exercises the big row tile, row padding and r-broadcast index_map
    e2 = jax.random.normal(ke2, (2, 300, entity_dim), jnp.float32)
    r2 = jax.random.normal(kr2, (1, 300, relation_dim), jnp.float32)
    out2 = jax.block_until_ready(
        beta_projection(e2, r2, params, entity_dim=entity_dim, num_layers=num_layers))
    ref2 = beta_projection_ref(e2, r2, params, num_layers=num_layers)
    assert out2.shape == (2, 300, entity_dim)
    assert jnp.allclose(out2, ref2, atol=1e-4, rtol=1e-4)

    print("KERNEL_OK")
</pallas_src>

<mosaic_0001>
module attributes {stable_mosaic.version = 11 : i64} {
  func.func @_beta_projection_kernel(%arg0: i32, %arg1: i32, %arg2: memref<1x8x128xf32, #tpu.memory_space<vmem>>, %arg3: memref<1x8x128xf32, #tpu.memory_space<vmem>>, %arg4: memref<128x128xf32, #tpu.memory_space<vmem>>, %arg5: memref<128x128xf32, #tpu.memory_space<vmem>>, %arg6: memref<1x128xf32, #tpu.memory_space<vmem>>, %arg7: memref<128x128xf32, #tpu.memory_space<vmem>>, %arg8: memref<1x128xf32, #tpu.memory_space<vmem>>, %arg9: memref<128x128xf32, #tpu.memory_space<vmem>>, %arg10: memref<1x128xf32, #tpu.memory_space<vmem>>, %arg11: memref<1x8x128xf32, #tpu.memory_space<vmem>>) attributes {dimension_semantics = [#tpu.dimension_semantics<parallel>, #tpu.dimension_semantics<parallel>], iteration_bounds = array<i64: 2, 1>, scalar_prefetch = 0 : i64, scratch_operands = 0 : i64, tpu.core_type = #tpu.core_type<tc>, window_params = [{transform_indices = @transform_0, window_bounds = array<i64: 1, 8, 128>}, {transform_indices = @transform_1, window_bounds = array<i64: 1, 8, 128>}, {pipeline_mode = #tpu.pipeline_mode<synchronous>, transform_indices = @transform_2, window_bounds = array<i64: 128, 128>}, {pipeline_mode = #tpu.pipeline_mode<synchronous>, transform_indices = @transform_3, window_bounds = array<i64: 128, 128>}, {pipeline_mode = #tpu.pipeline_mode<synchronous>, transform_indices = @transform_4, window_bounds = array<i64: 1, 128>}, {pipeline_mode = #tpu.pipeline_mode<synchronous>, transform_indices = @transform_5, window_bounds = array<i64: 128, 128>}, {pipeline_mode = #tpu.pipeline_mode<synchronous>, transform_indices = @transform_6, window_bounds = array<i64: 1, 128>}, {pipeline_mode = #tpu.pipeline_mode<synchronous>, transform_indices = @transform_7, window_bounds = array<i64: 128, 128>}, {pipeline_mode = #tpu.pipeline_mode<synchronous>, transform_indices = @transform_8, window_bounds = array<i64: 1, 128>}, {transform_indices = @transform_9, window_bounds = array<i64: 1, 8, 128>}]} {
    %c0 = arith.constant 0 : index
    %c0_0 = arith.constant 0 : index
    %c0_1 = arith.constant 0 : index
    %0 = vector.load %arg2[%c0, %c0_0, %c0_1] : memref<1x8x128xf32, #tpu.memory_space<vmem>>, vector<1x8x128xf32>
    %1 = vector.shape_cast %0 : vector<1x8x128xf32> to vector<8x128xf32>
    %c0_2 = arith.constant 0 : index
    %c0_3 = arith.constant 0 : index
    %c0_4 = arith.constant 0 : index
    %2 = vector.load %arg3[%c0_2, %c0_3, %c0_4] : memref<1x8x128xf32, #tpu.memory_space<vmem>>, vector<1x8x128xf32>
    %3 = vector.shape_cast %2 : vector<1x8x128xf32> to vector<8x128xf32>
    %c0_5 = arith.constant 0 : index
    %c0_6 = arith.constant 0 : index
    %4 = vector.load %arg4[%c0_5, %c0_6] : memref<128x128xf32, #tpu.memory_space<vmem>>, vector<128x128xf32>
    %cst = arith.constant dense<0.000000e+00> : vector<8x128xf32>
    %5 = tpu.matmul %1, %4, %cst {dimension_numbers = #tpu.dot_dimension_numbers<[1], [0], [0], [1], [0, 0, 1, 1], [], []>} : vector<8x128xf32>, vector<128x128xf32>, vector<8x128xf32> -> vector<8x128xf32>
    %c0_7 = arith.constant 0 : index
    %c0_8 = arith.constant 0 : index
    %6 = vector.load %arg5[%c0_7, %c0_8] : memref<128x128xf32, #tpu.memory_space<vmem>>, vector<128x128xf32>
    %cst_9 = arith.constant dense<0.000000e+00> : vector<8x128xf32>
    %7 = tpu.matmul %3, %6, %cst_9 {dimension_numbers = #tpu.dot_dimension_numbers<[1], [0], [0], [1], [0, 0, 1, 1], [], []>} : vector<8x128xf32>, vector<128x128xf32>, vector<8x128xf32> -> vector<8x128xf32>
    %8 = arith.addf %5, %7 : vector<8x128xf32>
    %c0_10 = arith.constant 0 : index
    %c0_11 = arith.constant 0 : index
    %9 = vector.load %arg6[%c0_10, %c0_11] : memref<1x128xf32, #tpu.memory_space<vmem>>, vector<1x128xf32>
    %10 = vector.broadcast %9 : vector<1x128xf32> to vector<8x128xf32>
    %11 = arith.addf %8, %10 : vector<8x128xf32>
    %cst_12 = arith.constant 0.000000e+00 : f32
    %12 = vector.broadcast %cst_12 : f32 to vector<8x128xf32>
    %13 = arith.maximumf %11, %12 : vector<8x128xf32>
    %c0_13 = arith.constant 0 : index
    %c0_14 = arith.constant 0 : index
    %14 = vector.load %arg7[%c0_13, %c0_14] : memref<128x128xf32, #tpu.memory_space<vmem>>, vector<128x128xf32>
    %c0_15 = arith.constant 0 : index
    %c0_16 = arith.constant 0 : index
    %15 = vector.load %arg8[%c0_15, %c0_16] : memref<1x128xf32, #tpu.memory_space<vmem>>, vector<1x128xf32>
    %cst_17 = arith.constant dense<0.000000e+00> : vector<8x128xf32>
    %16 = tpu.matmul %13, %14, %cst_17 {dimension_numbers = #tpu.dot_dimension_numbers<[1], [0], [0], [1], [0, 0, 1, 1], [], []>} : vector<8x128xf32>, vector<128x128xf32>, vector<8x128xf32> -> vector<8x128xf32>
    %17 = vector.broadcast %15 : vector<1x128xf32> to vector<8x128xf32>
    %18 = arith.addf %16, %17 : vector<8x128xf32>
    %cst_18 = arith.constant 0.000000e+00 : f32
    %19 = vector.broadcast %cst_18 : f32 to vector<8x128xf32>
    %20 = arith.maximumf %18, %19 : vector<8x128xf32>
    %c0_19 = arith.constant 0 : index
    %c0_20 = arith.constant 0 : index
    %21 = vector.load %arg9[%c0_19, %c0_20] : memref<128x128xf32, #tpu.memory_space<vmem>>, vector<128x128xf32>
    %c0_21 = arith.constant 0 : index
    %c0_22 = arith.constant 0 : index
    %22 = vector.load %arg10[%c0_21, %c0_22] : memref<1x128xf32, #tpu.memory_space<vmem>>, vector<1x128xf32>
    %cst_23 = arith.constant dense<0.000000e+00> : vector<8x128xf32>
    %23 = tpu.matmul %20, %21, %cst_23 {dimension_numbers = #tpu.dot_dimension_numbers<[1], [0], [0], [1], [0, 0, 1, 1], [], []>} : vector<8x128xf32>, vector<128x128xf32>, vector<8x128xf32> -> vector<8x128xf32>
    %24 = vector.broadcast %22 : vector<1x128xf32> to vector<8x128xf32>
    %25 = arith.addf %23, %24 : vector<8x128xf32>
    %cst_24 = arith.constant 1.000000e+00 : f32
    %26 = vector.broadcast %cst_24 : f32 to vector<8x128xf32>
    %27 = arith.addf %25, %26 : vector<8x128xf32>
    %cst_25 = arith.constant 5.000000e-02 : f32
    %cst_26 = arith.constant 1.000000e+09 : f32
    %28 = vector.broadcast %cst_25 : f32 to vector<8x128xf32>
    %29 = arith.maximumf %28, %27 : vector<8x128xf32>
    %30 = vector.broadcast %cst_26 : f32 to vector<8x128xf32>
    %31 = arith.minimumf %30, %29 : vector<8x128xf32>
    %c0_27 = arith.constant 0 : index
    %c0_28 = arith.constant 0 : index
    %c0_29 = arith.constant 0 : index
    %32 = vector.load %arg11[%c0_27, %c0_28, %c0_29] : memref<1x8x128xf32, #tpu.memory_space<vmem>>, vector<1x8x128xf32>
    %33 = vector.shape_cast %32 : vector<1x8x128xf32> to vector<8x128xf32>
    %34 = vector.shape_cast %31 : vector<8x128xf32> to vector<1x8x128xf32>
    tpu.vector_store %arg11[%c0_27, %c0_28, %c0_29], %34 {strides = array<i32>} : memref<1x8x128xf32, #tpu.memory_space<vmem>>, vector<1x8x128xf32>,
    return
  }
  func.func @transform_0(%arg0: i32, %arg1: i32) -> (i32, i32, i32) {
    %c0_i32 = arith.constant 0 : i32
    %c0_i32_0 = arith.constant 0 : i32
    %c0_i32_1 = arith.constant 0 : i32
    return %c0_i32, %arg1, %c0_i32_0 : i32, i32, i32
  }
  func.func @transform_1(%arg0: i32, %arg1: i32) -> (i32, i32, i32) {
    %c0_i32 = arith.constant 0 : i32
    %c0_i32_0 = arith.constant 0 : i32
    return %arg0, %arg1, %c0_i32 : i32, i32, i32
  }
  func.func @transform_2(%arg0: i32, %arg1: i32) -> (i32, i32) {
    %c0_i32 = arith.constant 0 : i32
    %c0_i32_0 = arith.constant 0 : i32
    %c0_i32_1 = arith.constant 0 : i32
    return %c0_i32, %c0_i32_0 : i32, i32
  }
  func.func @transform_3(%arg0: i32, %arg1: i32) -> (i32, i32) {
    %c0_i32 = arith.constant 0 : i32
    %c0_i32_0 = arith.constant 0 : i32
    %c0_i32_1 = arith.constant 0 : i32
    return %c0_i32, %c0_i32_0 : i32, i32
  }
  func.func @transform_4(%arg0: i32, %arg1: i32) -> (i32, i32) {
    %c0_i32 = arith.constant 0 : i32
    %c0_i32_0 = arith.constant 0 : i32
    %c0_i32_1 = arith.constant 0 : i32
    return %c0_i32, %c0_i32_0 : i32, i32
  }
  func.func @transform_5(%arg0: i32, %arg1: i32) -> (i32, i32) {
    %c0_i32 = arith.constant 0 : i32
    %c0_i32_0 = arith.constant 0 : i32
    %c0_i32_1 = arith.constant 0 : i32
    return %c0_i32, %c0_i32_0 : i32, i32
  }
  func.func @transform_6(%arg0: i32, %arg1: i32) -> (i32, i32) {
    %c0_i32 = arith.constant 0 : i32
    %c0_i32_0 = arith.constant 0 : i32
    %c0_i32_1 = arith.constant 0 : i32
    return %c0_i32, %c0_i32_0 : i32, i32
  }
  func.func @transform_7(%arg0: i32, %arg1: i32) -> (i32, i32) {
    %c0_i32 = arith.constant 0 : i32
    %c0_i32_0 = arith.constant 0 : i32
    %c0_i32_1 = arith.constant 0 : i32
    return %c0_i32, %c0_i32_0 : i32, i32
  }
  func.func @transform_8(%arg0: i32, %arg1: i32) -> (i32, i32) {
    %c0_i32 = arith.constant 0 : i32
    %c0_i32_0 = arith.constant 0 : i32
    %c0_i32_1 = arith.constant 0 : i32
    return %c0_i32, %c0_i32_0 : i32, i32
  }
  func.func @transform_9(%arg0: i32, %arg1: i32) -> (i32, i32, i32) {
    %c0_i32 = arith.constant 0 : i32
    %c0_i32_0 = arith.constant 0 : i32
    return %arg0, %arg1, %c0_i32 : i32, i32, i32
  }
}

module attributes {stable_mosaic.version = 11 : i64} {
  func.func @_beta_projection_kernel(%arg0: i32, %arg1: i32, %arg2: memref<1x8x128xf32, #tpu.memory_space<vmem>>, %arg3: memref<1x8x128xf32, #tpu.memory_space<vmem>>, %arg4: memref<128x128xf32, #tpu.memory_space<vmem>>, %arg5: memref<128x128xf32, #tpu.memory_space<vmem>>, %arg6: memref<1x128xf32, #tpu.memory_space<vmem>>, %arg7: memref<128x128xf32, #tpu.memory_space<vmem>>, %arg8: memref<1x128xf32, #tpu.memory_space<vmem>>, %arg9: memref<128x128xf32, #tpu.memory_space<vmem>>, %arg10: memref<1x128xf32, #tpu.memory_space<vmem>>, %arg11: memref<1x8x128xf32, #tpu.memory_space<vmem>>) attributes {dimension_semantics = [#tpu.dimension_semantics<parallel>, #tpu.dimension_semantics<parallel>], iteration_bounds = array<i64: 2, 1>, scalar_prefetch = 0 : i64, scratch_operands = 0 : i64, tpu.core_type = #tpu.core_type<tc>, window_params = [{transform_indices = @transform_0, window_bounds = array<i64: 1, 8, 128>}, {transform_indices = @transform_1, window_bounds = array<i64: 1, 8, 128>}, {pipeline_mode = #tpu.pipeline_mode<synchronous>, transform_indices = @transform_2, window_bounds = array<i64: 128, 128>}, {pipeline_mode = #tpu.pipeline_mode<synchronous>, transform_indices = @transform_3, window_bounds = array<i64: 128, 128>}, {pipeline_mode = #tpu.pipeline_mode<synchronous>, transform_indices = @transform_4, window_bounds = array<i64: 1, 128>}, {pipeline_mode = #tpu.pipeline_mode<synchronous>, transform_indices = @transform_5, window_bounds = array<i64: 128, 128>}, {pipeline_mode = #tpu.pipeline_mode<synchronous>, transform_indices = @transform_6, window_bounds = array<i64: 1, 128>}, {pipeline_mode = #tpu.pipeline_mode<synchronous>, transform_indices = @transform_7, window_bounds = array<i64: 128, 128>}, {pipeline_mode = #tpu.pipeline_mode<synchronous>, transform_indices = @transform_8, window_bounds = array<i64: 1, 128>}, {transform_indices = @transform_9, window_bounds = array<i64: 1, 8, 128>}]} {
    %c0 = arith.constant 0 : index
    %c0_0 = arith.constant 0 : index
    %c0_1 = arith.constant 0 : index
    %0 = vector.load %arg2[%c0, %c0_0, %c0_1] : memref<1x8x128xf32, #tpu.memory_space<vmem>>, vector<1x8x128xf32>
    %1 = vector.shape_cast %0 : vector<1x8x128xf32> to vector<8x128xf32>
    %c0_2 = arith.constant 0 : index
    %c0_3 = arith.constant 0 : index
    %c0_4 = arith.constant 0 : index
    %2 = vector.load %arg3[%c0_2, %c0_3, %c0_4] : memref<1x8x128xf32, #tpu.memory_space<vmem>>, vector<1x8x128xf32>
    %3 = vector.shape_cast %2 : vector<1x8x128xf32> to vector<8x128xf32>
    %c0_5 = arith.constant 0 : index
    %c0_6 = arith.constant 0 : index
    %4 = vector.load %arg4[%c0_5, %c0_6] : memref<128x128xf32, #tpu.memory_space<vmem>>, vector<128x128xf32>
    %cst = arith.constant dense<0.000000e+00> : vector<8x128xf32>
    %5 = tpu.matmul %1, %4, %cst {dimension_numbers = #tpu.dot_dimension_numbers<[1], [0], [0], [1], [0, 0, 1, 1], [], []>} : vector<8x128xf32>, vector<128x128xf32>, vector<8x128xf32> -> vector<8x128xf32>
    %c0_7 = arith.constant 0 : index
    %c0_8 = arith.constant 0 : index
    %6 = vector.load %arg5[%c0_7, %c0_8] : memref<128x128xf32, #tpu.memory_space<vmem>>, vector<128x128xf32>
    %cst_9 = arith.constant dense<0.000000e+00> : vector<8x128xf32>
    %7 = tpu.matmul %3, %6, %cst_9 {dimension_numbers = #tpu.dot_dimension_numbers<[1], [0], [0], [1], [0, 0, 1, 1], [], []>} : vector<8x128xf32>, vector<128x128xf32>, vector<8x128xf32> -> vector<8x128xf32>
    %8 = arith.addf %5, %7 : vector<8x128xf32>
    %c0_10 = arith.constant 0 : index
    %c0_11 = arith.constant 0 : index
    %9 = vector.load %arg6[%c0_10, %c0_11] : memref<1x128xf32, #tpu.memory_space<vmem>>, vector<1x128xf32>
    %10 = vector.broadcast %9 : vector<1x128xf32> to vector<8x128xf32>
    %11 = arith.addf %8, %10 : vector<8x128xf32>
    %cst_12 = arith.constant 0.000000e+00 : f32
    %12 = vector.broadcast %cst_12 : f32 to vector<8x128xf32>
    %13 = arith.maximumf %11, %12 : vector<8x128xf32>
    %c0_13 = arith.constant 0 : index
    %c0_14 = arith.constant 0 : index
    %14 = vector.load %arg7[%c0_13, %c0_14] : memref<128x128xf32, #tpu.memory_space<vmem>>, vector<128x128xf32>
    %c0_15 = arith.constant 0 : index
    %c0_16 = arith.constant 0 : index
    %15 = vector.load %arg8[%c0_15, %c0_16] : memref<1x128xf32, #tpu.memory_space<vmem>>, vector<1x128xf32>
    %cst_17 = arith.constant dense<0.000000e+00> : vector<8x128xf32>
    %16 = tpu.matmul %13, %14, %cst_17 {dimension_numbers = #tpu.dot_dimension_numbers<[1], [0], [0], [1], [0, 0, 1, 1], [], []>} : vector<8x128xf32>, vector<128x128xf32>, vector<8x128xf32> -> vector<8x128xf32>
    %17 = vector.broadcast %15 : vector<1x128xf32> to vector<8x128xf32>
    %18 = arith.addf %16, %17 : vector<8x128xf32>
    %cst_18 = arith.constant 0.000000e+00 : f32
    %19 = vector.broadcast %cst_18 : f32 to vector<8x128xf32>
    %20 = arith.maximumf %18, %19 : vector<8x128xf32>
    %c0_19 = arith.constant 0 : index
    %c0_20 = arith.constant 0 : index
    %21 = vector.load %arg9[%c0_19, %c0_20] : memref<128x128xf32, #tpu.memory_space<vmem>>, vector<128x128xf32>
    %c0_21 = arith.constant 0 : index
    %c0_22 = arith.constant 0 : index
    %22 = vector.load %arg10[%c0_21, %c0_22] : memref<1x128xf32, #tpu.memory_space<vmem>>, vector<1x128xf32>
    %cst_23 = arith.constant dense<0.000000e+00> : vector<8x128xf32>
    %23 = tpu.matmul %20, %21, %cst_23 {dimension_numbers = #tpu.dot_dimension_numbers<[1], [0], [0], [1], [0, 0, 1, 1], [], []>} : vector<8x128xf32>, vector<128x128xf32>, vector<8x128xf32> -> vector<8x128xf32>
    %24 = vector.broadcast %22 : vector<1x128xf32> to vector<8x128xf32>
    %25 = arith.addf %23, %24 : vector<8x128xf32>
    %cst_24 = arith.constant 1.000000e+00 : f32
    %26 = vector.broadcast %cst_24 : f32 to vector<8x128xf32>
    %27 = arith.addf %25, %26 : vector<8x128xf32>
    %cst_25 = arith.constant 5.000000e-02 : f32
    %cst_26 = arith.constant 1.000000e+09 : f32
    %28 = vector.broadcast %cst_25 : f32 to vector<8x128xf32>
    %29 = arith.maximumf %28, %27 : vector<8x128xf32>
    %30 = vector.broadcast %cst_26 : f32 to vector<8x128xf32>
    %31 = arith.minimumf %30, %29 : vector<8x128xf32>
    %c0_27 = arith.constant 0 : index
    %c0_28 = arith.constant 0 : index
    %c0_29 = arith.constant 0 : index
    %32 = vector.load %arg11[%c0_27, %c0_28, %c0_29] : memref<1x8x128xf32, #tpu.memory_space<vmem>>, vector<1x8x128xf32>
    %33 = vector.shape_cast %32 : vector<1x8x128xf32> to vector<8x128xf32>
    %34 = vector.shape_cast %31 : vector<8x128xf32> to vector<1x8x128xf32>
    tpu.vector_store %arg11[%c0_27, %c0_28, %c0_29], %34 {strides = array<i32>} : memref<1x8x128xf32, #tpu.memory_space<vmem>>, vector<1x8x128xf32>,
    return
  }
  func.func @transform_0(%arg0: i32, %arg1: i32) -> (i32, i32, i32) {
    %c0_i32 = arith.constant 0 : i32
    %c0_i32_0 = arith.constant 0 : i32
    %c0_i32_1 = arith.constant 0 : i32
    return %c0_i32, %arg1, %c0_i32_0 : i32, i32, i32
  }
  func.func @transform_1(%arg0: i32, %arg1: i32) -> (i32, i32, i32) {
    %c0_i32 = arith.constant 0 : i32
    %c0_i32_0 = arith.constant 0 : i32
    return %arg0, %arg1, %c0_i32 : i32, i32, i32
  }
  func.func @transform_2(%arg0: i32, %arg1: i32) -> (i32, i32) {
    %c0_i32 = arith.constant 0 : i32
    %c0_i32_0 = arith.constant 0 : i32
    %c0_i32_1 = arith.constant 0 : i32
    return %c0_i32, %c0_i32_0 : i32, i32
  }
  func.func @transform_3(%arg0: i32, %arg1: i32) -> (i32, i32) {
    %c0_i32 = arith.constant 0 : i32
    %c0_i32_0 = arith.constant 0 : i32
    %c0_i32_1 = arith.constant 0 : i32
    return %c0_i32, %c0_i32_0 : i32, i32
  }
  func.func @transform_4(%arg0: i32, %arg1: i32) -> (i32, i32) {
    %c0_i32 = arith.constant 0 : i32
    %c0_i32_0 = arith.constant 0 : i32
    %c0_i32_1 = arith.constant 0 : i32
    return %c0_i32, %c0_i32_0 : i32, i32
  }
  func.func @transform_5(%arg0: i32, %arg1: i32) -> (i32, i32) {
    %c0_i32 = arith.constant 0 : i32
    %c0_i32_0 = arith.constant 0 : i32
    %c0_i32_1 = arith.constant 0 : i32
    return %c0_i32, %c0_i32_0 : i32, i32
  }
  func.func @transform_6(%arg0: i32, %arg1: i32) -> (i32, i32) {
    %c0_i32 = arith.constant 0 : i32
    %c0_i32_0 = arith.constant 0 : i32
    %c0_i32_1 = arith.constant 0 : i32
    return %c0_i32, %c0_i32_0 : i32, i32
  }
  func.func @transform_7(%arg0: i32, %arg1: i32) -> (i32, i32) {
    %c0_i32 = arith.constant 0 : i32
    %c0_i32_0 = arith.constant 0 : i32
    %c0_i32_1 = arith.constant 0 : i32
    return %c0_i32, %c0_i32_0 : i32, i32
  }
  func.func @transform_8(%arg0: i32, %arg1: i32) -> (i32, i32) {
    %c0_i32 = arith.constant 0 : i32
    %c0_i32_0 = arith.constant 0 : i32
    %c0_i32_1 = arith.constant 0 : i32
    return %c0_i32, %c0_i32_0 : i32, i32
  }
  func.func @transform_9(%arg0: i32, %arg1: i32) -> (i32, i32, i32) {
    %c0_i32 = arith.constant 0 : i32
    %c0_i32_0 = arith.constant 0 : i32
    return %arg0, %arg1, %c0_i32 : i32, i32, i32
  }
}

</mosaic_0001>

<llo_original>
// kernel: tpu_custom_call.1
$region0: #{tpu_custom_call.1}
  #allocation0 [shape = 'u32[]', space=smem, size = 0x4, offset = 0x4, fixed_abs, tag = 'smem constant byte address 0x4 - core index']
  #allocation1 [shape = 'u32[144,128]{1,0:T(1,128)}', space=vmem, size = 0x12000, scoped, tag = 'internal scratch']
  %s0 = inlined_call_operand.hbm [shape: f32[1,8,128], index: 0, kind: input, shape index: {}]
  %s1 = inlined_call_operand.hbm [shape: f32[2,8,128], index: 1, kind: input, shape index: {}]
  %s2 = inlined_call_operand.hbm [shape: f32[128,128], index: 2, kind: input, shape index: {}]
  %s3 = inlined_call_operand.hbm [shape: f32[128,128], index: 3, kind: input, shape index: {}]
  %s4 = inlined_call_operand.vmem [shape: f32[1,128], index: 4, kind: input, shape index: {}]
  %s5 = inlined_call_operand.hbm [shape: f32[128,128], index: 5, kind: input, shape index: {}]
  %s6 = inlined_call_operand.vmem [shape: f32[1,128], index: 6, kind: input, shape index: {}]
  %s7 = inlined_call_operand.hbm [shape: f32[128,128], index: 7, kind: input, shape index: {}]
  %s8 = inlined_call_operand.vmem [shape: f32[1,128], index: 8, kind: input, shape index: {}]
  %s9 = inlined_call_operand.hbm [shape: f32[2,8,128], index: 9, kind: output, shape index: {}]
  %s10 = sld [smem:[#allocation0]]
  $region93: #{tpu_custom_call.1} parent=0
    _
  %s12 = ssub.s32 1, %s10
  %s13 = scalar_select 0, %s12, %s10
  $region1: #{tpu_custom_call.1} parent=0
    #allocation2 [shape = 'u8[4096]{0}', space=vmem, size = 0x1000, scoped, tag = 'input window, operand 0, single buffered']
    #allocation3 [shape = 's32[2]{0}', space=sflag, size = 0x8, scoped, tag = 'scoped memory for tpu_custom_call.1']
    #allocation4 [shape = 's32[2]{0}', space=sflag, size = 0x8, scoped, tag = 'scoped memory for tpu_custom_call.1']
    #allocation5 [shape = 'u8[8192]{0}', space=vmem, size = 0x2000, scoped, tag = 'input window, operand 1']
    #allocation6 [shape = 's32[2]{0}', space=sflag, size = 0x8, scoped, tag = 'scoped memory for tpu_custom_call.1']
    #allocation7 [shape = 'u8[65536]{0}', space=vmem, size = 0x10000, scoped, tag = 'input window, operand 2, single buffered']
    #allocation8 [shape = 'u8[65536]{0}', space=vmem, size = 0x10000, scoped, tag = 'input window, operand 3, single buffered']
    #allocation9 [shape = 's32[1]{0}', space=sflag, size = 0x4, scoped, tag = 'scoped memory for tpu_custom_call.1']
    #allocation10 [shape = 'u8[65536]{0}', space=vmem, size = 0x10000, scoped, tag = 'input window, operand 5, single buffered']
    #allocation11 [shape = 'u8[65536]{0}', space=vmem, size = 0x10000, scoped, tag = 'input window, operand 7, single buffered']
    #allocation12 [shape = 's32[1]{0}', space=sflag, size = 0x4, scoped, tag = 'scoped memory for tpu_custom_call.1']
    #allocation13 [shape = 'u8[8192]{0}', space=vmem, size = 0x2000, scoped, tag = 'output window, operand 0']
    %14 = vsyncpa [#allocation3], 0
    %15 = vsyncpa [#allocation6], 0
    %s16 = scalar_lea.sflag [#allocation6], 1
    %17 = vsyncpa %s16, 0
    %18 = vsyncpa [#allocation9], 0
    %19 = vsyncpa [#allocation12], 0
    %20 = vsyncpa [#allocation4], 0
    %s21 = scalar_lea.sflag [#allocation4], 1
    %22 = vsyncpa %s21, 0
    loop: start=0, step=1, limit=4
    $region2: #{tpu_custom_call.1} parent=1 // loop_pre_header
      _
    $region3: #{tpu_custom_call.1} parent=1 // loop_header
      %s24 = sphi 0, %s28
      %p25 = scmp.ge.s32.totalorder %s24, 4
      %s31 = sphi 0, %s43
      %s32 = sphi 0, %s39
      %s33 = sphi 0, %s31
      %s34 = sphi 0, %s32
      %s35 = sphi 0, %s33
      %s36 = sphi 0, %s34
      %s46 = sphi 0, %s48
      %s49 = sphi 0, %s46
      %s50 = sphi 0, %s49
      %s66 = sphi 0, %s50
      %s74 = sphi 0, %s76
      %s77 = sphi 0, %s74
      %s78 = sphi 0, %s77
      %s94 = sphi 0, %s78
      %s98 = sphi 0, %s98
      %s100 = sphi 0, %s98
      %s101 = sphi 0, %s100
      %s115 = sphi 0, %s101
      %s119 = sphi 0, %s119
      %s121 = sphi 0, %s119
      %s122 = sphi 0, %s121
      %s136 = sphi 0, %s122
      %s140 = sphi 0, %s140
      %s142 = sphi 0, %s140
      %s143 = sphi 0, %s142
      %s157 = sphi 0, %s143
      %s161 = sphi 0, %s161
      %s163 = sphi 0, %s161
      %s164 = sphi 0, %s163
      %s178 = sphi 0, %s164
      %s182 = sphi 0, %s182
      %s184 = sphi 0, %s182
      %s185 = sphi 0, %s184
      %s199 = sphi 0, %s185
      %s203 = sphi 0, %s203
      %s205 = sphi 0, %s203
      %s206 = sphi 0, %s205
      %s220 = sphi 0, %s206
      %s224 = sphi 0, %s224
      %s226 = sphi 0, %s224
      %s227 = sphi 0, %s226
      %s241 = sphi 0, %s227
      %s249 = sphi 0, %s251
      %s252 = sphi 0, %s249
      %s253 = sphi 0, %s252
      %s269 = sphi 0, %s253
    $region4: #{tpu_custom_call.1} parent=1 // loop_header_branch
      %27 = sbr.rel (%p25) target = $region8
    $region5: #{tpu_custom_call.1} parent=1 // loop_body
      %s29 = ssub.s32 %s24, 1
      %s30 = ssub.s32 %s24, 2
      %s37 = sadd.s32 1, %s32
      %p38 = scmp.ge.s32.totalorder %s37, 1
      %s39 = scalar_select %p38, 0, %s37
      %s40 = sadd.s32 1, %s31
      %s41 = scalar_select %p38, %s40, %s31
      %p42 = scmp.ge.s32.totalorder %s41, 2
      %s43 = scalar_select %p42, 0, %s41
      %s44 = ssub.s32 %s32, %s39
      %p45 = scmp.eq.s32.totalorder %s44, 0
      %s47 = sadd.s32 %s46, 1
      %s48 = scalar_select %p45, %s46, %s47
      %p51 = pneg %p45
      %p52 = scmp.eq.s32.totalorder %s24, 1
      %p53 = por %p51, %p52
      %p54 = scmp.ne.s32.totalorder %s46, %s49
      %p55 = scmp.eq.s32.totalorder %s24, 0
      %p56 = por %p54, %p55
      %p57 = scmp.ne.s32.totalorder %s46, %s49
      %p58 = scmp.eq.s32.totalorder %s29, 1
      %p59 = por %p57, %p58
      %p60 = scmp.ne.s32.totalorder %s49, %s50
      %p61 = scmp.eq.s32.totalorder %s29, 0
      %p62 = por %p60, %p61
      %p63 = scmp.ne.s32.totalorder %s49, %s50
      %p64 = scmp.eq.s32.totalorder %s30, 1
      %p65 = por %p63, %p64
      %p67 = scmp.ne.s32.totalorder %s50, %s66
      %p68 = scmp.eq.s32.totalorder %s30, 0
      %p69 = por %p67, %p68
      %s70 = ssub.s32 %s31, %s43
      %s71 = ssub.s32 %s32, %s39
      %s72 = sor.u32 %s70, %s71
      %p73 = scmp.eq.s32.totalorder %s72, 0
      %s75 = sadd.s32 %s74, 1
      %s76 = scalar_select %p73, %s74, %s75
      %p79 = pneg %p73
      %p80 = scmp.eq.s32.totalorder %s24, 1
      %p81 = por %p79, %p80
      %p82 = scmp.ne.s32.totalorder %s74, %s77
      %p83 = scmp.eq.s32.totalorder %s24, 0
      %p84 = por %p82, %p83
      %p85 = scmp.ne.s32.totalorder %s74, %s77
      %p86 = scmp.eq.s32.totalorder %s29, 1
      %p87 = por %p85, %p86
      %p88 = scmp.ne.s32.totalorder %s77, %s78
      %p89 = scmp.eq.s32.totalorder %s29, 0
      %p90 = por %p88, %p89
      %p91 = scmp.ne.s32.totalorder %s77, %s78
      %p92 = scmp.eq.s32.totalorder %s30, 1
      %p93 = por %p91, %p92
      %p95 = scmp.ne.s32.totalorder %s78, %s94
      %p96 = scmp.eq.s32.totalorder %s30, 0
      %p97 = por %p95, %p96
      %s99 = sadd.s32 %s98, 1
      %p102 = scmp.eq.s32.totalorder %s24, 1
      %p103 = scmp.ne.s32.totalorder %s98, %s100
      %p104 = scmp.eq.s32.totalorder %s24, 0
      %p105 = por %p103, %p104
      %p106 = scmp.ne.s32.totalorder %s98, %s100
      %p107 = scmp.eq.s32.totalorder %s29, 1
      %p108 = por %p106, %p107
      %p109 = scmp.ne.s32.totalorder %s100, %s101
      %p110 = scmp.eq.s32.totalorder %s29, 0
      %p111 = por %p109, %p110
      %p112 = scmp.ne.s32.totalorder %s100, %s101
      %p113 = scmp.eq.s32.totalorder %s30, 1
      %p114 = por %p112, %p113
      %p116 = scmp.ne.s32.totalorder %s101, %s115
      %p117 = scmp.eq.s32.totalorder %s30, 0
      %p118 = por %p116, %p117
      %s120 = sadd.s32 %s119, 1
      %p123 = scmp.eq.s32.totalorder %s24, 1
      %p124 = scmp.ne.s32.totalorder %s119, %s121
      %p125 = scmp.eq.s32.totalorder %s24, 0
      %p126 = por %p124, %p125
      %p127 = scmp.ne.s32.totalorder %s119, %s121
      %p128 = scmp.eq.s32.totalorder %s29, 1
      %p129 = por %p127, %p128
      %p130 = scmp.ne.s32.totalorder %s121, %s122
      %p131 = scmp.eq.s32.totalorder %s29, 0
      %p132 = por %p130, %p131
      %p133 = scmp.ne.s32.totalorder %s121, %s122
      %p134 = scmp.eq.s32.totalorder %s30, 1
      %p135 = por %p133, %p134
      %p137 = scmp.ne.s32.totalorder %s122, %s136
      %p138 = scmp.eq.s32.totalorder %s30, 0
      %p139 = por %p137, %p138
      %s141 = sadd.s32 %s140, 1
      %p144 = scmp.eq.s32.totalorder %s24, 1
      %p145 = scmp.ne.s32.totalorder %s140, %s142
      %p146 = scmp.eq.s32.totalorder %s24, 0
      %p147 = por %p145, %p146
      %p148 = scmp.ne.s32.totalorder %s140, %s142
      %p149 = scmp.eq.s32.totalorder %s29, 1
      %p150 = por %p148, %p149
      %p151 = scmp.ne.s32.totalorder %s142, %s143
      %p152 = scmp.eq.s32.totalorder %s29, 0
      %p153 = por %p151, %p152
      %p154 = scmp.ne.s32.totalorder %s142, %s143
      %p155 = scmp.eq.s32.totalorder %s30, 1
      %p156 = por %p154, %p155
      %p158 = scmp.ne.s32.totalorder %s143, %s157
      %p159 = scmp.eq.s32.totalorder %s30, 0
      %p160 = por %p158, %p159
      %s162 = sadd.s32 %s161, 1
      %p165 = scmp.eq.s32.totalorder %s24, 1
      %p166 = scmp.ne.s32.totalorder %s161, %s163
      %p167 = scmp.eq.s32.totalorder %s24, 0
      %p168 = por %p166, %p167
      %p169 = scmp.ne.s32.totalorder %s161, %s163
      %p170 = scmp.eq.s32.totalorder %s29, 1
      %p171 = por %p169, %p170
      %p172 = scmp.ne.s32.totalorder %s163, %s164
      %p173 = scmp.eq.s32.totalorder %s29, 0
      %p174 = por %p172, %p173
      %p175 = scmp.ne.s32.totalorder %s163, %s164
      %p176 = scmp.eq.s32.totalorder %s30, 1
      %p177 = por %p175, %p176
      %p179 = scmp.ne.s32.totalorder %s164, %s178
      %p180 = scmp.eq.s32.totalorder %s30, 0
      %p181 = por %p179, %p180
      %s183 = sadd.s32 %s182, 1
      %p186 = scmp.eq.s32.totalorder %s24, 1
      %p187 = scmp.ne.s32.totalorder %s182, %s184
      %p188 = scmp.eq.s32.totalorder %s24, 0
      %p189 = por %p187, %p188
      %p190 = scmp.ne.s32.totalorder %s182, %s184
      %p191 = scmp.eq.s32.totalorder %s29, 1
      %p192 = por %p190, %p191
      %p193 = scmp.ne.s32.totalorder %s184, %s185
      %p194 = scmp.eq.s32.totalorder %s29, 0
      %p195 = por %p193, %p194
      %p196 = scmp.ne.s32.totalorder %s184, %s185
      %p197 = scmp.eq.s32.totalorder %s30, 1
      %p198 = por %p196, %p197
      %p200 = scmp.ne.s32.totalorder %s185, %s199
      %p201 = scmp.eq.s32.totalorder %s30, 0
      %p202 = por %p200, %p201
      %s204 = sadd.s32 %s203, 1
      %p207 = scmp.eq.s32.totalorder %s24, 1
      %p208 = scmp.ne.s32.totalorder %s203, %s205
      %p209 = scmp.eq.s32.totalorder %s24, 0
      %p210 = por %p208, %p209
      %p211 = scmp.ne.s32.totalorder %s203, %s205
      %p212 = scmp.eq.s32.totalorder %s29, 1
      %p213 = por %p211, %p212
      %p214 = scmp.ne.s32.totalorder %s205, %s206
      %p215 = scmp.eq.s32.totalorder %s29, 0
      %p216 = por %p214, %p215
      %p217 = scmp.ne.s32.totalorder %s205, %s206
      %p218 = scmp.eq.s32.totalorder %s30, 1
      %p219 = por %p217, %p218
      %p221 = scmp.ne.s32.totalorder %s206, %s220
      %p222 = scmp.eq.s32.totalorder %s30, 0
      %p223 = por %p221, %p222
      %s225 = sadd.s32 %s224, 1
      %p228 = scmp.eq.s32.totalorder %s24, 1
      %p229 = scmp.ne.s32.totalorder %s224, %s226
      %p230 = scmp.eq.s32.totalorder %s24, 0
      %p231 = por %p229, %p230
      %p232 = scmp.ne.s32.totalorder %s224, %s226
      %p233 = scmp.eq.s32.totalorder %s29, 1
      %p234 = por %p232, %p233
      %p235 = scmp.ne.s32.totalorder %s226, %s227
      %p236 = scmp.eq.s32.totalorder %s29, 0
      %p237 = por %p235, %p236
      %p238 = scmp.ne.s32.totalorder %s226, %s227
      %p239 = scmp.eq.s32.totalorder %s30, 1
      %p240 = por %p238, %p239
      %p242 = scmp.ne.s32.totalorder %s227, %s241
      %p243 = scmp.eq.s32.totalorder %s30, 0
      %p244 = por %p242, %p243
      %s245 = ssub.s32 %s31, %s43
      %s246 = ssub.s32 %s32, %s39
      %s247 = sor.u32 %s245, %s246
      %p248 = scmp.eq.s32.totalorder %s247, 0
      %s250 = sadd.s32 %s249, 1
      %s251 = scalar_select %p248, %s249, %s250
      %p254 = pneg %p248
      %p255 = scmp.eq.s32.totalorder %s24, 1
      %p256 = por %p254, %p255
      %p257 = scmp.ne.s32.totalorder %s249, %s252
      %p258 = scmp.eq.s32.totalorder %s24, 0
      %p259 = por %p257, %p258
      %p260 = scmp.ne.s32.totalorder %s249, %s252
      %p261 = scmp.eq.s32.totalorder %s29, 1
      %p262 = por %p260, %p261
      %p263 = scmp.ne.s32.totalorder %s252, %s253
      %p264 = scmp.eq.s32.totalorder %s29, 0
      %p265 = por %p263, %p264
      %p266 = scmp.ne.s32.totalorder %s252, %s253
      %p267 = scmp.eq.s32.totalorder %s30, 1
      %p268 = por %p266, %p267
      %p270 = scmp.ne.s32.totalorder %s253, %s269
      %p271 = scmp.eq.s32.totalorder %s30, 0
      %p272 = por %p270, %p271
      %p273 = scmp.le.s32.totalorder 1, %s24
      %p274 = scmp.lt.s32.totalorder %s24, 3
      %p275 = pnand %p273, %p274
      %p276 = pneg %p275
      // Predicated region
      $region9: #{tpu_custom_call.1} parent=5 // pred_check
        _
      $region10: #{tpu_custom_call.1} parent=5 // pred_check_branch
        %278 = sbr.rel (%p275) target = $region12
      $region11: #{tpu_custom_call.1} parent=5 // pred_region
        %s279 = ssub.s32 %s24, 1
        // Predicated region
        $region13: #{tpu_custom_call.1} parent=11 // pred_check
          %p280 = pneg %p62
        $region14: #{tpu_custom_call.1} parent=11 // pred_check_branch
          %282 = sbr.rel (%p280) target = $region16
        $region15: #{tpu_custom_call.1} parent=11 // pred_region
          %s284 = ssub.s32 128, 128
          %285 = vsyncadd [#allocation3], %s284
          %s286 = smul.addr %s34, 128
          %s287 = scalar_lea.hbm %s0, %s286
          %s289 = sshll.u32 [#allocation2], 4
          %s290 = int_to_ptr.vmem [resolvable:$true] %s289
          %292 = dma.hbm_to_vmem [thread:$0]  %s287, 128, %s290, [#allocation3]
        $region16: #{tpu_custom_call.1} parent=11 // pred_fallthru
          _
        // Predicated region
        $region17: #{tpu_custom_call.1} parent=11 // pred_check
          %p293 = pneg %p111
        $region18: #{tpu_custom_call.1} parent=11 // pred_check_branch
          %295 = sbr.rel (%p293) target = $region20
        $region19: #{tpu_custom_call.1} parent=11 // pred_region
          %s297 = ssub.s32 2048, 2048
          %298 = vsyncadd [#allocation6], %s297
          %s299 = sshll.u32 [#allocation7], 4
          %s300 = int_to_ptr.vmem [resolvable:$true] %s299
          %305 = dma.hbm_to_vmem [thread:$0]  %s2, 2048, %s300, [#allocation6], 128, 128, 8
        $region20: #{tpu_custom_call.1} parent=11 // pred_fallthru
          _
        // Predicated region
        $region21: #{tpu_custom_call.1} parent=11 // pred_check
          %p306 = pneg %p132
        $region22: #{tpu_custom_call.1} parent=11 // pred_check_branch
          %308 = sbr.rel (%p306) target = $region24
        $region23: #{tpu_custom_call.1} parent=11 // pred_region
          %s310 = ssub.s32 2048, 2048
          %311 = vsyncadd [#allocation9], %s310
          %s312 = sshll.u32 [#allocation8], 4
          %s313 = int_to_ptr.vmem [resolvable:$true] %s312
          %318 = dma.hbm_to_vmem [thread:$0]  %s3, 2048, %s313, [#allocation9], 128, 128, 8
        $region24: #{tpu_custom_call.1} parent=11 // pred_fallthru
          _
        // Predicated region
        $region25: #{tpu_custom_call.1} parent=11 // pred_check
          %p319 = pneg %p153
        $region26: #{tpu_custom_call.1} parent=11 // pred_check_branch
          %321 = sbr.rel (%p319) target = $region28
        $region27: #{tpu_custom_call.1} parent=11 // pred_region
          _
        $region28: #{tpu_custom_call.1} parent=11 // pred_fallthru
          _
        // Predicated region
        $region29: #{tpu_custom_call.1} parent=11 // pred_check
          %p322 = pneg %p174
        $region30: #{tpu_custom_call.1} parent=11 // pred_check_branch
          %324 = sbr.rel (%p322) target = $region32
        $region31: #{tpu_custom_call.1} parent=11 // pred_region
          %s326 = ssub.s32 2048, 2048
          %327 = vsyncadd [#allocation9], %s326
          %s328 = sshll.u32 [#allocation10], 4
          %s329 = int_to_ptr.vmem [resolvable:$true] %s328
          %334 = dma.hbm_to_vmem [thread:$0]  %s5, 2048, %s329, [#allocation9], 128, 128, 8
        $region32: #{tpu_custom_call.1} parent=11 // pred_fallthru
          _
        // Predicated region
        $region33: #{tpu_custom_call.1} parent=11 // pred_check
          %p335 = pneg %p195
        $region34: #{tpu_custom_call.1} parent=11 // pred_check_branch
          %337 = sbr.rel (%p335) target = $region36
        $region35: #{tpu_custom_call.1} parent=11 // pred_region
          _
        $region36: #{tpu_custom_call.1} parent=11 // pred_fallthru
          _
        // Predicated region
        $region37: #{tpu_custom_call.1} parent=11 // pred_check
          %p338 = pneg %p216
        $region38: #{tpu_custom_call.1} parent=11 // pred_check_branch
          %340 = sbr.rel (%p338) target = $region40
        $region39: #{tpu_custom_call.1} parent=11 // pred_region
          %s342 = ssub.s32 2048, 2048
          %343 = vsyncadd [#allocation12], %s342
          %s344 = sshll.u32 [#allocation11], 4
          %s345 = int_to_ptr.vmem [resolvable:$true] %s344
          %350 = dma.hbm_to_vmem [thread:$0]  %s7, 2048, %s345, [#allocation12], 128, 128, 8
        $region40: #{tpu_custom_call.1} parent=11 // pred_fallthru
          _
        // Predicated region
        $region41: #{tpu_custom_call.1} parent=11 // pred_check
          %p351 = pneg %p237
        $region42: #{tpu_custom_call.1} parent=11 // pred_check_branch
          %353 = sbr.rel (%p351) target = $region44
        $region43: #{tpu_custom_call.1} parent=11 // pred_region
          _
        $region44: #{tpu_custom_call.1} parent=11 // pred_fallthru
          _
      $region12: #{tpu_custom_call.1} parent=5 // pred_fallthru
        _
      %p354 = scmp.lt.s32.totalorder %s24, 2
      // Predicated region
      $region45: #{tpu_custom_call.1} parent=5 // pred_check
        %p355 = pneg %p354
      $region46: #{tpu_custom_call.1} parent=5 // pred_check_branch
        %357 = sbr.rel (%p355) target = $region48
      $region47: #{tpu_custom_call.1} parent=5 // pred_region
        // Predicated region
        $region49: #{tpu_custom_call.1} parent=47 // pred_check
          %p358 = pneg %p84
        $region50: #{tpu_custom_call.1} parent=47 // pred_check_branch
          %360 = sbr.rel (%p358) target = $region52
        $region51: #{tpu_custom_call.1} parent=47 // pred_region
          %s361 = sand.u32 %s24, 1
          %s362 = scalar_lea.sflag [#allocation6], %s361
          %s363 = sand.u32 %s74, 1
          %s364 = smul.addr %s363, 8
          %s365 = scalar_lea.vmem [#allocation5], %s364
          %s367 = ssub.s32 128, 128
          %368 = vsyncadd %s362, %s367
          %s369 = sadd.s32 %s32, %s31
          %s370 = smul.addr %s369, 128
          %s371 = scalar_lea.hbm %s1, %s370
          %s373 = sshll.u32 %s365, 4
          %s374 = int_to_ptr.vmem [resolvable:$true] %s373
          %376 = dma.hbm_to_vmem [thread:$0]  %s371, 128, %s374, %s362
        $region52: #{tpu_custom_call.1} parent=47 // pred_fallthru
          _
      $region48: #{tpu_custom_call.1} parent=5 // pred_fallthru
        _
      %p377 = scmp.le.s32.totalorder 1, %s24
      %p378 = scmp.lt.s32.totalorder %s24, 3
      %p379 = pnand %p377, %p378
      %p380 = pneg %p379
      // Predicated region
      $region53: #{tpu_custom_call.1} parent=5 // pred_check
        _
      $region54: #{tpu_custom_call.1} parent=5 // pred_check_branch
        %382 = sbr.rel (%p379) target = $region56
      $region55: #{tpu_custom_call.1} parent=5 // pred_region
        %s383 = ssub.s32 %s24, 1
        // Predicated region
        $region57: #{tpu_custom_call.1} parent=55 // pred_check
          %p384 = pneg %p62
        $region58: #{tpu_custom_call.1} parent=55 // pred_check_branch
          %386 = sbr.rel (%p384) target = $region60
        $region59: #{tpu_custom_call.1} parent=55 // pred_region
          %387 = dma.done [#allocation3], 128
        $region60: #{tpu_custom_call.1} parent=55 // pred_fallthru
          _
        %s388 = sand.u32 %s29, 1
        %s389 = scalar_lea.sflag [#allocation6], %s388
        %s390 = sand.u32 %s77, 1
        %s391 = smul.addr %s390, 8
        %s392 = scalar_lea.vmem [#allocation5], %s391
        // Predicated region
        $region61: #{tpu_custom_call.1} parent=55 // pred_check
          %p393 = pneg %p90
        $region62: #{tpu_custom_call.1} parent=55 // pred_check_branch
          %395 = sbr.rel (%p393) target = $region64
        $region63: #{tpu_custom_call.1} parent=55 // pred_region
          %396 = dma.done %s389, 128
        $region64: #{tpu_custom_call.1} parent=55 // pred_fallthru
          _
        // Predicated region
        $region65: #{tpu_custom_call.1} parent=55 // pred_check
          %p397 = pneg %p111
        $region66: #{tpu_custom_call.1} parent=55 // pred_check_branch
          %399 = sbr.rel (%p397) target = $region68
        $region67: #{tpu_custom_call.1} parent=55 // pred_region
          %400 = dma.done [#allocation6], 2048
        $region68: #{tpu_custom_call.1} parent=55 // pred_fallthru
          _
        // Predicated region
        $region69: #{tpu_custom_call.1} parent=55 // pred_check
          %p401 = pneg %p132
        $region70: #{tpu_custom_call.1} parent=55 // pred_check_branch
          %403 = sbr.rel (%p401) target = $region72
        $region71: #{tpu_custom_call.1} parent=55 // pred_region
          %404 = dma.done [#allocation9], 2048
        $region72: #{tpu_custom_call.1} parent=55 // pred_fallthru
          _
        // Predicated region
        $region73: #{tpu_custom_call.1} parent=55 // pred_check
          %p405 = pneg %p174
        $region74: #{tpu_custom_call.1} parent=55 // pred_check_branch
          %407 = sbr.rel (%p405) target = $region76
        $region75: #{tpu_custom_call.1} parent=55 // pred_region
          %408 = dma.done [#allocation9], 2048
        $region76: #{tpu_custom_call.1} parent=55 // pred_fallthru
          _
        // Predicated region
        $region77: #{tpu_custom_call.1} parent=55 // pred_check
          %p409 = pneg %p216
        $region78: #{tpu_custom_call.1} parent=55 // pred_check_branch
          %411 = sbr.rel (%p409) target = $region80
        $region79: #{tpu_custom_call.1} parent=55 // pred_region
          %412 = dma.done [#allocation12], 2048
        $region80: #{tpu_custom_call.1} parent=55 // pred_fallthru
          _
        %p413 = pneg %p62
        %p414 = pneg %p59
        %s415 = sand.u32 %s29, 1
        %s416 = scalar_lea.sflag [#allocation6], %s415
        %s417 = sand.u32 %s77, 1
        %s418 = smul.addr %s417, 8
        %s419 = scalar_lea.vmem [#allocation5], %s418
        %p420 = pneg %p90
        %p421 = pneg %p87
        %p422 = pneg %p111
        %p423 = pneg %p108
        %p424 = pneg %p132
        %p425 = pneg %p129
        %p426 = pneg %p153
        %p427 = pneg %p150
        %p428 = pneg %p174
        %p429 = pneg %p171
        %p430 = pneg %p195
        %p431 = pneg %p192
        %p432 = pneg %p216
        %p433 = pneg %p213
        %p434 = pneg %p237
        %p435 = pneg %p234
        %p436 = pneg %p265
        %p437 = pneg %p262
        %s438 = sand.u32 %s252, 1
        %s439 = scalar_lea.sflag [#allocation4], %s438
        %s440 = sand.u32 %s252, 1
        %s441 = smul.addr %s440, 8
        %s442 = scalar_lea.vmem [#allocation13], %s441
        %v443 = vld [vmem:[#allocation2] sm:$0xff]
        %v444 = vld [vmem:[%s392] sm:$0xff]
        %v445 = vld [vmem:[#allocation7] sm:$0xff]
        %v446 = vld [vmem:[#allocation7 + $0x8] sm:$0xff]
        %v447 = vld [vmem:[#allocation7 + $0x10] sm:$0xff]
        %v448 = vld [vmem:[#allocation7 + $0x18] sm:$0xff]
        %v449 = vld [vmem:[#allocation7 + $0x20] sm:$0xff]
        %v450 = vld [vmem:[#allocation7 + $0x28] sm:$0xff]
        %v451 = vld [vmem:[#allocation7 + $0x30] sm:$0xff]
        %v452 = vld [vmem:[#allocation7 + $0x38] sm:$0xff]
        %v453 = vld [vmem:[#allocation7 + $0x40] sm:$0xff]
        %v454 = vld [vmem:[#allocation7 + $0x48] sm:$0xff]
        %v455 = vld [vmem:[#allocation7 + $0x50] sm:$0xff]
        %v456 = vld [vmem:[#allocation7 + $0x58] sm:$0xff]
        %v457 = vld [vmem:[#allocation7 + $0x60] sm:$0xff]
        %v458 = vld [vmem:[#allocation7 + $0x68] sm:$0xff]
        %v459 = vld [vmem:[#allocation7 + $0x70] sm:$0xff]
        %v460 = vld [vmem:[#allocation7 + $0x78] sm:$0xff]
        %v461 = vld [vmem:[#allocation8] sm:$0xff]
        %v462 = vld [vmem:[#allocation8 + $0x8] sm:$0xff]
        %v463 = vld [vmem:[#allocation8 + $0x10] sm:$0xff]
        %v464 = vld [vmem:[#allocation8 + $0x18] sm:$0xff]
        %v465 = vld [vmem:[#allocation8 + $0x20] sm:$0xff]
        %v466 = vld [vmem:[#allocation8 + $0x28] sm:$0xff]
        %v467 = vld [vmem:[#allocation8 + $0x30] sm:$0xff]
        %v468 = vld [vmem:[#allocation8 + $0x38] sm:$0xff]
        %v469 = vld [vmem:[#allocation8 + $0x40] sm:$0xff]
        %v470 = vld [vmem:[#allocation8 + $0x48] sm:$0xff]
        %v471 = vld [vmem:[#allocation8 + $0x50] sm:$0xff]
        %v472 = vld [vmem:[#allocation8 + $0x58] sm:$0xff]
        %v473 = vld [vmem:[#allocation8 + $0x60] sm:$0xff]
        %v474 = vld [vmem:[#allocation8 + $0x68] sm:$0xff]
        %v475 = vld [vmem:[#allocation8 + $0x70] sm:$0xff]
        %v476 = vld [vmem:[#allocation8 + $0x78] sm:$0xff]
        %477 = vmatprep.subr.mxu0 0.0
        %478 = vmatpush1.msra.mxu0 %v476
        %479 = vmatprep.subr.mxu0 0.0
        %480 = vmatpush1.msra.mxu0 %v475
        %481 = vmatprep.subr.mxu0 0.0
        %482 = vmatpush1.msra.mxu0 %v474
        %483 = vmatprep.subr.mxu0 0.0
        %484 = vmatpush1.msra.mxu0 %v473
        %485 = vmatprep.subr.mxu0 0.0
        %486 = vmatpush1.msra.mxu0 %v472
        %487 = vmatprep.subr.mxu0 0.0
        %488 = vmatpush1.msra.mxu0 %v471
        %489 = vmatprep.subr.mxu0 0.0
        %490 = vmatpush1.msra.mxu0 %v470
        %491 = vmatprep.subr.mxu0 0.0
        %492 = vmatpush1.msra.mxu0 %v469
        %493 = vmatprep.subr.mxu0 0.0
        %494 = vmatpush1.msra.mxu0 %v468
        %495 = vmatprep.subr.mxu0 0.0
        %496 = vmatpush1.msra.mxu0 %v467
        %497 = vmatprep.subr.mxu0 0.0
        %498 = vmatpush1.msra.mxu0 %v466
        %499 = vmatprep.subr.mxu0 0.0
        %500 = vmatpush1.msra.mxu0 %v465
        %501 = vmatprep.subr.mxu0 0.0
        %502 = vmatpush1.msra.mxu0 %v464
        %503 = vmatprep.subr.mxu0 0.0
        %504 = vmatpush1.msra.mxu0 %v463
        %505 = vmatprep.subr.mxu0 0.0
        %506 = vmatpush1.msra.mxu0 %v462
        %507 = vmatprep.subr.mxu0 0.0
        %508 = vmatpush1.msra.mxu0 %v461
        %509 = vmatprep.subr.mxu0 0.0
        %510 = vmatpush2.msra.mxu0 0.0
        %511 = vmatprep.subr.mxu0 0.0
        %512 = vmatpush2.msra.mxu0 0.0
        %513 = vmatprep.subr.mxu0 0.0
        %514 = vmatpush2.msra.mxu0 0.0
        %515 = vmatprep.subr.mxu0 0.0
        %516 = vmatpush2.msra.mxu0 0.0
        %517 = vmatprep.subr.mxu0 0.0
        %518 = vmatpush2.msra.mxu0 0.0
        %519 = vmatprep.subr.mxu0 0.0
        %520 = vmatpush2.msra.mxu0 0.0
        %521 = vmatprep.subr.mxu0 0.0
        %522 = vmatpush2.msra.mxu0 0.0
        %523 = vmatprep.subr.mxu0 0.0
        %524 = vmatpush2.msra.mxu0 0.0
        %525 = vmatprep.subr.mxu0 0.0
        %526 = vmatpush2.msra.mxu0 0.0
        %527 = vmatprep.subr.mxu0 0.0
        %528 = vmatpush2.msra.mxu0 0.0
        %529 = vmatprep.subr.mxu0 0.0
        %530 = vmatpush2.msra.mxu0 0.0
        %531 = vmatprep.subr.mxu0 0.0
        %532 = vmatpush2.msra.mxu0 0.0
        %533 = vmatprep.subr.mxu0 0.0
        %534 = vmatpush2.msra.mxu0 0.0
        %535 = vmatprep.subr.mxu0 0.0
        %536 = vmatpush2.msra.mxu0 0.0
        %537 = vmatprep.subr.mxu0 0.0
        %538 = vmatpush2.msra.mxu0 0.0
        %539 = vmatprep.subr.mxu0 0.0
        %540 = vmatpush2.msra.mxu0 0.0
        %541 = vmatprep.mubr.f32.mxu0 0.0
        %542 = vmatmul.mubr.f32.gmra.mxu0 %v444
        %v543 = vpop.f32.mrf.mxu0
        %v544 = vadd.f32 0.0, %v543
        %v545 = vpop.f32.mrf.mxu0
        %546 = vdwg.mxu0
        %547 = vmatprep.subr.mxu0 0.0
        %548 = vmatpush1.msra.mxu0 %v460
        %549 = vmatprep.subr.mxu0 0.0
        %550 = vmatpush1.msra.mxu0 %v459
        %551 = vmatprep.subr.mxu0 0.0
        %552 = vmatpush1.msra.mxu0 %v458
        %553 = vmatprep.subr.mxu0 0.0
        %554 = vmatpush1.msra.mxu0 %v457
        %555 = vmatprep.subr.mxu0 0.0
        %556 = vmatpush1.msra.mxu0 %v456
        %557 = vmatprep.subr.mxu0 0.0
        %558 = vmatpush1.msra.mxu0 %v455
        %559 = vmatprep.subr.mxu0 0.0
        %560 = vmatpush1.msra.mxu0 %v454
        %561 = vmatprep.subr.mxu0 0.0
        %562 = vmatpush1.msra.mxu0 %v453
        %563 = vmatprep.subr.mxu0 0.0
        %564 = vmatpush1.msra.mxu0 %v452
        %565 = vmatprep.subr.mxu0 0.0
        %566 = vmatpush1.msra.mxu0 %v451
        %567 = vmatprep.subr.mxu0 0.0
        %568 = vmatpush1.msra.mxu0 %v450
        %569 = vmatprep.subr.mxu0 0.0
        %570 = vmatpush1.msra.mxu0 %v449
        %571 = vmatprep.subr.mxu0 0.0
        %572 = vmatpush1.msra.mxu0 %v448
        %573 = vmatprep.subr.mxu0 0.0
        %574 = vmatpush1.msra.mxu0 %v447
        %575 = vmatprep.subr.mxu0 0.0
        %576 = vmatpush1.msra.mxu0 %v446
        %577 = vmatprep.subr.mxu0 0.0
        %578 = vmatpush1.msra.mxu0 %v445
        %579 = vmatprep.subr.mxu0 0.0
        %580 = vmatpush2.msra.mxu0 0.0
        %581 = vmatprep.subr.mxu0 0.0
        %582 = vmatpush2.msra.mxu0 0.0
        %583 = vmatprep.subr.mxu0 0.0
        %584 = vmatpush2.msra.mxu0 0.0
        %585 = vmatprep.subr.mxu0 0.0
        %586 = vmatpush2.msra.mxu0 0.0
        %587 = vmatprep.subr.mxu0 0.0
        %588 = vmatpush2.msra.mxu0 0.0
        %589 = vmatprep.subr.mxu0 0.0
        %590 = vmatpush2.msra.mxu0 0.0
        %591 = vmatprep.subr.mxu0 0.0
        %592 = vmatpush2.msra.mxu0 0.0
        %593 = vmatprep.subr.mxu0 0.0
        %594 = vmatpush2.msra.mxu0 0.0
        %595 = vmatprep.subr.mxu0 0.0
        %596 = vmatpush2.msra.mxu0 0.0
        %597 = vmatprep.subr.mxu0 0.0
        %598 = vmatpush2.msra.mxu0 0.0
        %599 = vmatprep.subr.mxu0 0.0
        %600 = vmatpush2.msra.mxu0 0.0
        %601 = vmatprep.subr.mxu0 0.0
        %602 = vmatpush2.msra.mxu0 0.0
        %603 = vmatprep.subr.mxu0 0.0
        %604 = vmatpush2.msra.mxu0 0.0
        %605 = vmatprep.subr.mxu0 0.0
        %606 = vmatpush2.msra.mxu0 0.0
        %607 = vmatprep.subr.mxu0 0.0
        %608 = vmatpush2.msra.mxu0 0.0
        %609 = vmatprep.subr.mxu0 0.0
        %610 = vmatpush2.msra.mxu0 0.0
        %611 = vmatprep.mubr.f32.mxu0 0.0
        %612 = vmatmul.mubr.f32.gmra.mxu0 %v443
        %v613 = vpop.f32.mrf.mxu0
        %v614 = vadd.f32 %v544, %v613
        %v615 = vpop.f32.mrf.mxu0
        %616 = vdwg.mxu0
        %v617 = vld [vmem:[%s4] sm:$0x1]
        %v619 = vlaneseq
        %v620 = vshrl.u32 %v619, 7
        %v621 = vsub.s32 0, %v620
        %v622 = vrot.slane %v617, %v621
        %v624 = vadd.f32 %v614, %v622
        %v625 = vmax.f32 %v624, 0.0
        %v626 = vld [vmem:[#allocation10] sm:$0xff]
        %v627 = vld [vmem:[#allocation10 + $0x8] sm:$0xff]
        %v628 = vld [vmem:[#allocation10 + $0x10] sm:$0xff]
        %v629 = vld [vmem:[#allocation10 + $0x18] sm:$0xff]
        %v630 = vld [vmem:[#allocation10 + $0x20] sm:$0xff]
        %v631 = vld [vmem:[#allocation10 + $0x28] sm:$0xff]
        %v632 = vld [vmem:[#allocation10 + $0x30] sm:$0xff]
        %v633 = vld [vmem:[#allocation10 + $0x38] sm:$0xff]
        %v634 = vld [vmem:[#allocation10 + $0x40] sm:$0xff]
        %v635 = vld [vmem:[#allocation10 + $0x48] sm:$0xff]
        %v636 = vld [vmem:[#allocation10 + $0x50] sm:$0xff]
        %v637 = vld [vmem:[#allocation10 + $0x58] sm:$0xff]
        %v638 = vld [vmem:[#allocation10 + $0x60] sm:$0xff]
        %v639 = vld [vmem:[#allocation10 + $0x68] sm:$0xff]
        %v640 = vld [vmem:[#allocation10 + $0x70] sm:$0xff]
        %v641 = vld [vmem:[#allocation10 + $0x78] sm:$0xff]
        %v642 = vld [vmem:[%s6] sm:$0x1]
        %v644 = vlaneseq
        %v645 = vshrl.u32 %v644, 7
        %v646 = vsub.s32 0, %v645
        %v647 = vrot.slane %v642, %v646
        %649 = vmatprep.subr.mxu0 0.0
        %650 = vmatpush1.msra.mxu0 %v641
        %651 = vmatprep.subr.mxu0 0.0
        %652 = vmatpush1.msra.mxu0 %v640
        %653 = vmatprep.subr.mxu0 0.0
        %654 = vmatpush1.msra.mxu0 %v639
        %655 = vmatprep.subr.mxu0 0.0
        %656 = vmatpush1.msra.mxu0 %v638
        %657 = vmatprep.subr.mxu0 0.0
        %658 = vmatpush1.msra.mxu0 %v637
        %659 = vmatprep.subr.mxu0 0.0
        %660 = vmatpush1.msra.mxu0 %v636
        %661 = vmatprep.subr.mxu0 0.0
        %662 = vmatpush1.msra.mxu0 %v635
        %663 = vmatprep.subr.mxu0 0.0
        %664 = vmatpush1.msra.mxu0 %v634
        %665 = vmatprep.subr.mxu0 0.0
        %666 = vmatpush1.msra.mxu0 %v633
        %667 = vmatprep.subr.mxu0 0.0
        %668 = vmatpush1.msra.mxu0 %v632
        %669 = vmatprep.subr.mxu0 0.0
        %670 = vmatpush1.msra.mxu0 %v631
        %671 = vmatprep.subr.mxu0 0.0
        %672 = vmatpush1.msra.mxu0 %v630
        %673 = vmatprep.subr.mxu0 0.0
        %674 = vmatpush1.msra.mxu0 %v629
        %675 = vmatprep.subr.mxu0 0.0
        %676 = vmatpush1.msra.mxu0 %v628
        %677 = vmatprep.subr.mxu0 0.0
        %678 = vmatpush1.msra.mxu0 %v627
        %679 = vmatprep.subr.mxu0 0.0
        %680 = vmatpush1.msra.mxu0 %v626
        %681 = vmatprep.subr.mxu0 0.0
        %682 = vmatpush2.msra.mxu0 0.0
        %683 = vmatprep.subr.mxu0 0.0
        %684 = vmatpush2.msra.mxu0 0.0
        %685 = vmatprep.subr.mxu0 0.0
        %686 = vmatpush2.msra.mxu0 0.0
        %687 = vmatprep.subr.mxu0 0.0
        %688 = vmatpush2.msra.mxu0 0.0
        %689 = vmatprep.subr.mxu0 0.0
        %690 = vmatpush2.msra.mxu0 0.0
        %691 = vmatprep.subr.mxu0 0.0
        %692 = vmatpush2.msra.mxu0 0.0
        %693 = vmatprep.subr.mxu0 0.0
        %694 = vmatpush2.msra.mxu0 0.0
        %695 = vmatprep.subr.mxu0 0.0
        %696 = vmatpush2.msra.mxu0 0.0
        %697 = vmatprep.subr.mxu0 0.0
        %698 = vmatpush2.msra.mxu0 0.0
        %699 = vmatprep.subr.mxu0 0.0
        %700 = vmatpush2.msra.mxu0 0.0
        %701 = vmatprep.subr.mxu0 0.0
        %702 = vmatpush2.msra.mxu0 0.0
        %703 = vmatprep.subr.mxu0 0.0
        %704 = vmatpush2.msra.mxu0 0.0
        %705 = vmatprep.subr.mxu0 0.0
        %706 = vmatpush2.msra.mxu0 0.0
        %707 = vmatprep.subr.mxu0 0.0
        %708 = vmatpush2.msra.mxu0 0.0
        %709 = vmatprep.subr.mxu0 0.0
        %710 = vmatpush2.msra.mxu0 0.0
        %711 = vmatprep.subr.mxu0 0.0
        %712 = vmatpush2.msra.mxu0 0.0
        %713 = vmatprep.mubr.f32.mxu0 0.0
        %714 = vmatmul.mubr.f32.gmra.mxu0 %v625
        %v715 = vpop.f32.mrf.mxu0
        %v716 = vadd.f32 %v647, %v715
        %v717 = vpop.f32.mrf.mxu0
        %718 = vdwg.mxu0
        %v719 = vmax.f32 %v716, 0.0
        %v720 = vld [vmem:[#allocation11] sm:$0xff]
        %v721 = vld [vmem:[#allocation11 + $0x8] sm:$0xff]
        %v722 = vld [vmem:[#allocation11 + $0x10] sm:$0xff]
        %v723 = vld [vmem:[#allocation11 + $0x18] sm:$0xff]
        %v724 = vld [vmem:[#allocation11 + $0x20] sm:$0xff]
        %v725 = vld [vmem:[#allocation11 + $0x28] sm:$0xff]
        %v726 = vld [vmem:[#allocation11 + $0x30] sm:$0xff]
        %v727 = vld [vmem:[#allocation11 + $0x38] sm:$0xff]
        %v728 = vld [vmem:[#allocation11 + $0x40] sm:$0xff]
        %v729 = vld [vmem:[#allocation11 + $0x48] sm:$0xff]
        %v730 = vld [vmem:[#allocation11 + $0x50] sm:$0xff]
        %v731 = vld [vmem:[#allocation11 + $0x58] sm:$0xff]
        %v732 = vld [vmem:[#allocation11 + $0x60] sm:$0xff]
        %v733 = vld [vmem:[#allocation11 + $0x68] sm:$0xff]
        %v734 = vld [vmem:[#allocation11 + $0x70] sm:$0xff]
        %v735 = vld [vmem:[#allocation11 + $0x78] sm:$0xff]
        %v736 = vld [vmem:[%s8] sm:$0x1]
        %v738 = vlaneseq
        %v739 = vshrl.u32 %v738, 7
        %v740 = vsub.s32 0, %v739
        %v741 = vrot.slane %v736, %v740
        %743 = vmatprep.subr.mxu0 0.0
        %744 = vmatpush1.msra.mxu0 %v735
        %745 = vmatprep.subr.mxu0 0.0
        %746 = vmatpush1.msra.mxu0 %v734
        %747 = vmatprep.subr.mxu0 0.0
        %748 = vmatpush1.msra.mxu0 %v733
        %749 = vmatprep.subr.mxu0 0.0
        %750 = vmatpush1.msra.mxu0 %v732
        %751 = vmatprep.subr.mxu0 0.0
        %752 = vmatpush1.msra.mxu0 %v731
        %753 = vmatprep.subr.mxu0 0.0
        %754 = vmatpush1.msra.mxu0 %v730
        %755 = vmatprep.subr.mxu0 0.0
        %756 = vmatpush1.msra.mxu0 %v729
        %757 = vmatprep.subr.mxu0 0.0
        %758 = vmatpush1.msra.mxu0 %v728
        %759 = vmatprep.subr.mxu0 0.0
        %760 = vmatpush1.msra.mxu0 %v727
        %761 = vmatprep.subr.mxu0 0.0
        %762 = vmatpush1.msra.mxu0 %v726
        %763 = vmatprep.subr.mxu0 0.0
        %764 = vmatpush1.msra.mxu0 %v725
        %765 = vmatprep.subr.mxu0 0.0
        %766 = vmatpush1.msra.mxu0 %v724
        %767 = vmatprep.subr.mxu0 0.0
        %768 = vmatpush1.msra.mxu0 %v723
        %769 = vmatprep.subr.mxu0 0.0
        %770 = vmatpush1.msra.mxu0 %v722
        %771 = vmatprep.subr.mxu0 0.0
        %772 = vmatpush1.msra.mxu0 %v721
        %773 = vmatprep.subr.mxu0 0.0
        %774 = vmatpush1.msra.mxu0 %v720
        %775 = vmatprep.subr.mxu0 0.0
        %776 = vmatpush2.msra.mxu0 0.0
        %777 = vmatprep.subr.mxu0 0.0
        %778 = vmatpush2.msra.mxu0 0.0
        %779 = vmatprep.subr.mxu0 0.0
        %780 = vmatpush2.msra.mxu0 0.0
        %781 = vmatprep.subr.mxu0 0.0
        %782 = vmatpush2.msra.mxu0 0.0
        %783 = vmatprep.subr.mxu0 0.0
        %784 = vmatpush2.msra.mxu0 0.0
        %785 = vmatprep.subr.mxu0 0.0
        %786 = vmatpush2.msra.mxu0 0.0
        %787 = vmatprep.subr.mxu0 0.0
        %788 = vmatpush2.msra.mxu0 0.0
        %789 = vmatprep.subr.mxu0 0.0
        %790 = vmatpush2.msra.mxu0 0.0
        %791 = vmatprep.subr.mxu0 0.0
        %792 = vmatpush2.msra.mxu0 0.0
        %793 = vmatprep.subr.mxu0 0.0
        %794 = vmatpush2.msra.mxu0 0.0
        %795 = vmatprep.subr.mxu0 0.0
        %796 = vmatpush2.msra.mxu0 0.0
        %797 = vmatprep.subr.mxu0 0.0
        %798 = vmatpush2.msra.mxu0 0.0
        %799 = vmatprep.subr.mxu0 0.0
        %800 = vmatpush2.msra.mxu0 0.0
        %801 = vmatprep.subr.mxu0 0.0
        %802 = vmatpush2.msra.mxu0 0.0
        %803 = vmatprep.subr.mxu0 0.0
        %804 = vmatpush2.msra.mxu0 0.0
        %805 = vmatprep.subr.mxu0 0.0
        %806 = vmatpush2.msra.mxu0 0.0
        %807 = vmatprep.mubr.f32.mxu0 0.0
        %808 = vmatmul.mubr.f32.gmra.mxu0 %v719
        %v809 = vpop.f32.mrf.mxu0
        %v810 = vadd.f32 %v741, %v809
        %v811 = vpop.f32.mrf.mxu0
        %812 = vdwg.mxu0
        %v813 = vadd.f32 %v810, 1.0
        %v814 = vmax.f32 %v813, 0.05
        %v815 = vmin.f32 %v814, 1e+09
        %816 = vst [vmem:[%s442] sm:$0xff] %v815
        %s817 = sand.u32 %s252, 1
        %s818 = scalar_lea.sflag [#allocation4], %s817
        %s819 = sand.u32 %s252, 1
        %s820 = smul.addr %s819, 8
        %s821 = scalar_lea.vmem [#allocation13], %s820
        // Predicated region
        $region81: #{tpu_custom_call.1} parent=55 // pred_check
          %p822 = pneg %p262
        $region82: #{tpu_custom_call.1} parent=55 // pred_check_branch
          %824 = sbr.rel (%p822) target = $region84
        $region83: #{tpu_custom_call.1} parent=55 // pred_region
          %s826 = ssub.s32 128, 128
          %827 = vsyncadd %s818, %s826
          %s828 = sadd.s32 %s34, %s33
          %s829 = smul.addr %s828, 128
          %s830 = scalar_lea.hbm %s9, %s829
          %s832 = sshll.u32 %s821, 4
          %s833 = int_to_ptr.vmem [resolvable:$true] %s832
          %835 = dma.vmem_to_hbm [thread:$0]  %s833, 128, %s830, %s818
        $region84: #{tpu_custom_call.1} parent=55 // pred_fallthru
          _
      $region56: #{tpu_custom_call.1} parent=5 // pred_fallthru
        _
      %p836 = scmp.le.s32.totalorder 2, %s24
      // Predicated region
      $region85: #{tpu_custom_call.1} parent=5 // pred_check
        %p837 = pneg %p836
      $region86: #{tpu_custom_call.1} parent=5 // pred_check_branch
        %839 = sbr.rel (%p837) target = $region88
      $region87: #{tpu_custom_call.1} parent=5 // pred_region
        %s840 = ssub.s32 %s24, 2
        // Predicated region
        $region89: #{tpu_custom_call.1} parent=87 // pred_check
          %p841 = pneg %p268
        $region90: #{tpu_custom_call.1} parent=87 // pred_check_branch
          %843 = sbr.rel (%p841) target = $region92
        $region91: #{tpu_custom_call.1} parent=87 // pred_region
          %s844 = sand.u32 %s253, 1
          %s845 = scalar_lea.sflag [#allocation4], %s844
          %s846 = sand.u32 %s253, 1
          %s847 = smul.addr %s846, 8
          %s848 = scalar_lea.vmem [#allocation13], %s847
          %849 = dma.done %s845, 128
        $region92: #{tpu_custom_call.1} parent=87 // pred_fallthru
          _
      $region88: #{tpu_custom_call.1} parent=5 // pred_fallthru
        _
    $region6: #{tpu_custom_call.1} parent=1 // loop_footer
      %s28 = sadd.s32 1, %s24
    $region7: #{tpu_custom_call.1} parent=1 // loop_footer_branch
      %23 = sbr.rel target = $region3
    $region8: #{tpu_custom_call.1} parent=1 // loop_exit
      _
    %850 = vsyncpa [#allocation3], 1
    %s851 = scalar_lea.sflag [#allocation3], 1
    %852 = vsyncpa %s851, 1
    %853 = vsyncpa [#allocation6], 1
    %s854 = scalar_lea.sflag [#allocation6], 1
    %855 = vsyncpa %s854, 1
    %856 = vsyncpa [#allocation9], 1
    %857 = vsyncpa [#allocation12], 1
    %858 = vsyncpa [#allocation4], 1
    %s859 = scalar_lea.sflag [#allocation4], 1
    %860 = vsyncpa %s859, 1

// kernel: tpu_custom_call.1
$region0: #{tpu_custom_call.1}
  #allocation0 [shape = 'u32[]', space=smem, size = 0x4, offset = 0x4, fixed_abs, tag = 'smem constant byte address 0x4 - core index']
  #allocation1 [shape = 'u32[144,128]{1,0:T(1,128)}', space=vmem, size = 0x12000, scoped, tag = 'internal scratch']
  %s0 = inlined_call_operand.hbm [shape: f32[1,8,128], index: 0, kind: input, shape index: {}]
  %s1 = inlined_call_operand.hbm [shape: f32[2,8,128], index: 1, kind: input, shape index: {}]
  %s2 = inlined_call_operand.hbm [shape: f32[128,128], index: 2, kind: input, shape index: {}]
  %s3 = inlined_call_operand.hbm [shape: f32[128,128], index: 3, kind: input, shape index: {}]
  %s4 = inlined_call_operand.vmem [shape: f32[1,128], index: 4, kind: input, shape index: {}]
  %s5 = inlined_call_operand.hbm [shape: f32[128,128], index: 5, kind: input, shape index: {}]
  %s6 = inlined_call_operand.vmem [shape: f32[1,128], index: 6, kind: input, shape index: {}]
  %s7 = inlined_call_operand.hbm [shape: f32[128,128], index: 7, kind: input, shape index: {}]
  %s8 = inlined_call_operand.vmem [shape: f32[1,128], index: 8, kind: input, shape index: {}]
  %s9 = inlined_call_operand.hbm [shape: f32[2,8,128], index: 9, kind: output, shape index: {}]
  %s10 = sld [smem:[#allocation0]]
  $region93: #{tpu_custom_call.1} parent=0
    _
  %s12 = ssub.s32 1, %s10
  %s13 = scalar_select 0, %s12, %s10
  $region1: #{tpu_custom_call.1} parent=0
    #allocation2 [shape = 'u8[4096]{0}', space=vmem, size = 0x1000, scoped, tag = 'input window, operand 0, single buffered']
    #allocation3 [shape = 's32[2]{0}', space=sflag, size = 0x8, scoped, tag = 'scoped memory for tpu_custom_call.1']
    #allocation4 [shape = 's32[2]{0}', space=sflag, size = 0x8, scoped, tag = 'scoped memory for tpu_custom_call.1']
    #allocation5 [shape = 'u8[8192]{0}', space=vmem, size = 0x2000, scoped, tag = 'input window, operand 1']
    #allocation6 [shape = 's32[2]{0}', space=sflag, size = 0x8, scoped, tag = 'scoped memory for tpu_custom_call.1']
    #allocation7 [shape = 'u8[65536]{0}', space=vmem, size = 0x10000, scoped, tag = 'input window, operand 2, single buffered']
    #allocation8 [shape = 'u8[65536]{0}', space=vmem, size = 0x10000, scoped, tag = 'input window, operand 3, single buffered']
    #allocation9 [shape = 's32[1]{0}', space=sflag, size = 0x4, scoped, tag = 'scoped memory for tpu_custom_call.1']
    #allocation10 [shape = 'u8[65536]{0}', space=vmem, size = 0x10000, scoped, tag = 'input window, operand 5, single buffered']
    #allocation11 [shape = 'u8[65536]{0}', space=vmem, size = 0x10000, scoped, tag = 'input window, operand 7, single buffered']
    #allocation12 [shape = 's32[1]{0}', space=sflag, size = 0x4, scoped, tag = 'scoped memory for tpu_custom_call.1']
    #allocation13 [shape = 'u8[8192]{0}', space=vmem, size = 0x2000, scoped, tag = 'output window, operand 0']
    %14 = vsyncpa [#allocation3], 0
    %15 = vsyncpa [#allocation6], 0
    %s16 = scalar_lea.sflag [#allocation6], 1
    %17 = vsyncpa %s16, 0
    %18 = vsyncpa [#allocation9], 0
    %19 = vsyncpa [#allocation12], 0
    %20 = vsyncpa [#allocation4], 0
    %s21 = scalar_lea.sflag [#allocation4], 1
    %22 = vsyncpa %s21, 0
    loop: start=0, step=1, limit=4
    $region2: #{tpu_custom_call.1} parent=1 // loop_pre_header
      _
    $region3: #{tpu_custom_call.1} parent=1 // loop_header
      %s24 = sphi 0, %s28
      %p25 = scmp.ge.s32.totalorder %s24, 4
      %s31 = sphi 0, %s43
      %s32 = sphi 0, %s39
      %s33 = sphi 0, %s31
      %s34 = sphi 0, %s32
      %s35 = sphi 0, %s33
      %s36 = sphi 0, %s34
      %s46 = sphi 0, %s48
      %s49 = sphi 0, %s46
      %s50 = sphi 0, %s49
      %s66 = sphi 0, %s50
      %s74 = sphi 0, %s76
      %s77 = sphi 0, %s74
      %s78 = sphi 0, %s77
      %s94 = sphi 0, %s78
      %s98 = sphi 0, %s98
      %s100 = sphi 0, %s98
      %s101 = sphi 0, %s100
      %s115 = sphi 0, %s101
      %s119 = sphi 0, %s119
      %s121 = sphi 0, %s119
      %s122 = sphi 0, %s121
      %s136 = sphi 0, %s122
      %s140 = sphi 0, %s140
      %s142 = sphi 0, %s140
      %s143 = sphi 0, %s142
      %s157 = sphi 0, %s143
      %s161 = sphi 0, %s161
      %s163 = sphi 0, %s161
      %s164 = sphi 0, %s163
      %s178 = sphi 0, %s164
      %s182 = sphi 0, %s182
      %s184 = sphi 0, %s182
      %s185 = sphi 0, %s184
      %s199 = sphi 0, %s185
      %s203 = sphi 0, %s203
      %s205 = sphi 0, %s203
      %s206 = sphi 0, %s205
      %s220 = sphi 0, %s206
      %s224 = sphi 0, %s224
      %s226 = sphi 0, %s224
      %s227 = sphi 0, %s226
      %s241 = sphi 0, %s227
      %s249 = sphi 0, %s251
      %s252 = sphi 0, %s249
      %s253 = sphi 0, %s252
      %s269 = sphi 0, %s253
    $region4: #{tpu_custom_call.1} parent=1 // loop_header_branch
      %27 = sbr.rel (%p25) target = $region8
    $region5: #{tpu_custom_call.1} parent=1 // loop_body
      %s29 = ssub.s32 %s24, 1
      %s30 = ssub.s32 %s24, 2
      %s37 = sadd.s32 1, %s32
      %p38 = scmp.ge.s32.totalorder %s37, 1
      %s39 = scalar_select %p38, 0, %s37
      %s40 = sadd.s32 1, %s31
      %s41 = scalar_select %p38, %s40, %s31
      %p42 = scmp.ge.s32.totalorder %s41, 2
      %s43 = scalar_select %p42, 0, %s41
      %s44 = ssub.s32 %s32, %s39
      %p45 = scmp.eq.s32.totalorder %s44, 0
      %s47 = sadd.s32 %s46, 1
      %s48 = scalar_select %p45, %s46, %s47
      %p51 = pneg %p45
      %p52 = scmp.eq.s32.totalorder %s24, 1
      %p53 = por %p51, %p52
      %p54 = scmp.ne.s32.totalorder %s46, %s49
      %p55 = scmp.eq.s32.totalorder %s24, 0
      %p56 = por %p54, %p55
      %p57 = scmp.ne.s32.totalorder %s46, %s49
      %p58 = scmp.eq.s32.totalorder %s29, 1
      %p59 = por %p57, %p58
      %p60 = scmp.ne.s32.totalorder %s49, %s50
      %p61 = scmp.eq.s32.totalorder %s29, 0
      %p62 = por %p60, %p61
      %p63 = scmp.ne.s32.totalorder %s49, %s50
      %p64 = scmp.eq.s32.totalorder %s30, 1
      %p65 = por %p63, %p64
      %p67 = scmp.ne.s32.totalorder %s50, %s66
      %p68 = scmp.eq.s32.totalorder %s30, 0
      %p69 = por %p67, %p68
      %s70 = ssub.s32 %s31, %s43
      %s71 = ssub.s32 %s32, %s39
      %s72 = sor.u32 %s70, %s71
      %p73 = scmp.eq.s32.totalorder %s72, 0
      %s75 = sadd.s32 %s74, 1
      %s76 = scalar_select %p73, %s74, %s75
      %p79 = pneg %p73
      %p80 = scmp.eq.s32.totalorder %s24, 1
      %p81 = por %p79, %p80
      %p82 = scmp.ne.s32.totalorder %s74, %s77
      %p83 = scmp.eq.s32.totalorder %s24, 0
      %p84 = por %p82, %p83
      %p85 = scmp.ne.s32.totalorder %s74, %s77
      %p86 = scmp.eq.s32.totalorder %s29, 1
      %p87 = por %p85, %p86
      %p88 = scmp.ne.s32.totalorder %s77, %s78
      %p89 = scmp.eq.s32.totalorder %s29, 0
      %p90 = por %p88, %p89
      %p91 = scmp.ne.s32.totalorder %s77, %s78
      %p92 = scmp.eq.s32.totalorder %s30, 1
      %p93 = por %p91, %p92
      %p95 = scmp.ne.s32.totalorder %s78, %s94
      %p96 = scmp.eq.s32.totalorder %s30, 0
      %p97 = por %p95, %p96
      %s99 = sadd.s32 %s98, 1
      %p102 = scmp.eq.s32.totalorder %s24, 1
      %p103 = scmp.ne.s32.totalorder %s98, %s100
      %p104 = scmp.eq.s32.totalorder %s24, 0
      %p105 = por %p103, %p104
      %p106 = scmp.ne.s32.totalorder %s98, %s100
      %p107 = scmp.eq.s32.totalorder %s29, 1
      %p108 = por %p106, %p107
      %p109 = scmp.ne.s32.totalorder %s100, %s101
      %p110 = scmp.eq.s32.totalorder %s29, 0
      %p111 = por %p109, %p110
      %p112 = scmp.ne.s32.totalorder %s100, %s101
      %p113 = scmp.eq.s32.totalorder %s30, 1
      %p114 = por %p112, %p113
      %p116 = scmp.ne.s32.totalorder %s101, %s115
      %p117 = scmp.eq.s32.totalorder %s30, 0
      %p118 = por %p116, %p117
      %s120 = sadd.s32 %s119, 1
      %p123 = scmp.eq.s32.totalorder %s24, 1
      %p124 = scmp.ne.s32.totalorder %s119, %s121
      %p125 = scmp.eq.s32.totalorder %s24, 0
      %p126 = por %p124, %p125
      %p127 = scmp.ne.s32.totalorder %s119, %s121
      %p128 = scmp.eq.s32.totalorder %s29, 1
      %p129 = por %p127, %p128
      %p130 = scmp.ne.s32.totalorder %s121, %s122
      %p131 = scmp.eq.s32.totalorder %s29, 0
      %p132 = por %p130, %p131
      %p133 = scmp.ne.s32.totalorder %s121, %s122
      %p134 = scmp.eq.s32.totalorder %s30, 1
      %p135 = por %p133, %p134
      %p137 = scmp.ne.s32.totalorder %s122, %s136
      %p138 = scmp.eq.s32.totalorder %s30, 0
      %p139 = por %p137, %p138
      %s141 = sadd.s32 %s140, 1
      %p144 = scmp.eq.s32.totalorder %s24, 1
      %p145 = scmp.ne.s32.totalorder %s140, %s142
      %p146 = scmp.eq.s32.totalorder %s24, 0
      %p147 = por %p145, %p146
      %p148 = scmp.ne.s32.totalorder %s140, %s142
      %p149 = scmp.eq.s32.totalorder %s29, 1
      %p150 = por %p148, %p149
      %p151 = scmp.ne.s32.totalorder %s142, %s143
      %p152 = scmp.eq.s32.totalorder %s29, 0
      %p153 = por %p151, %p152
      %p154 = scmp.ne.s32.totalorder %s142, %s143
      %p155 = scmp.eq.s32.totalorder %s30, 1
      %p156 = por %p154, %p155
      %p158 = scmp.ne.s32.totalorder %s143, %s157
      %p159 = scmp.eq.s32.totalorder %s30, 0
      %p160 = por %p158, %p159
      %s162 = sadd.s32 %s161, 1
      %p165 = scmp.eq.s32.totalorder %s24, 1
      %p166 = scmp.ne.s32.totalorder %s161, %s163
      %p167 = scmp.eq.s32.totalorder %s24, 0
      %p168 = por %p166, %p167
      %p169 = scmp.ne.s32.totalorder %s161, %s163
      %p170 = scmp.eq.s32.totalorder %s29, 1
      %p171 = por %p169, %p170
      %p172 = scmp.ne.s32.totalorder %s163, %s164
      %p173 = scmp.eq.s32.totalorder %s29, 0
      %p174 = por %p172, %p173
      %p175 = scmp.ne.s32.totalorder %s163, %s164
      %p176 = scmp.eq.s32.totalorder %s30, 1
      %p177 = por %p175, %p176
      %p179 = scmp.ne.s32.totalorder %s164, %s178
      %p180 = scmp.eq.s32.totalorder %s30, 0
      %p181 = por %p179, %p180
      %s183 = sadd.s32 %s182, 1
      %p186 = scmp.eq.s32.totalorder %s24, 1
      %p187 = scmp.ne.s32.totalorder %s182, %s184
      %p188 = scmp.eq.s32.totalorder %s24, 0
      %p189 = por %p187, %p188
      %p190 = scmp.ne.s32.totalorder %s182, %s184
      %p191 = scmp.eq.s32.totalorder %s29, 1
      %p192 = por %p190, %p191
      %p193 = scmp.ne.s32.totalorder %s184, %s185
      %p194 = scmp.eq.s32.totalorder %s29, 0
      %p195 = por %p193, %p194
      %p196 = scmp.ne.s32.totalorder %s184, %s185
      %p197 = scmp.eq.s32.totalorder %s30, 1
      %p198 = por %p196, %p197
      %p200 = scmp.ne.s32.totalorder %s185, %s199
      %p201 = scmp.eq.s32.totalorder %s30, 0
      %p202 = por %p200, %p201
      %s204 = sadd.s32 %s203, 1
      %p207 = scmp.eq.s32.totalorder %s24, 1
      %p208 = scmp.ne.s32.totalorder %s203, %s205
      %p209 = scmp.eq.s32.totalorder %s24, 0
      %p210 = por %p208, %p209
      %p211 = scmp.ne.s32.totalorder %s203, %s205
      %p212 = scmp.eq.s32.totalorder %s29, 1
      %p213 = por %p211, %p212
      %p214 = scmp.ne.s32.totalorder %s205, %s206
      %p215 = scmp.eq.s32.totalorder %s29, 0
      %p216 = por %p214, %p215
      %p217 = scmp.ne.s32.totalorder %s205, %s206
      %p218 = scmp.eq.s32.totalorder %s30, 1
      %p219 = por %p217, %p218
      %p221 = scmp.ne.s32.totalorder %s206, %s220
      %p222 = scmp.eq.s32.totalorder %s30, 0
      %p223 = por %p221, %p222
      %s225 = sadd.s32 %s224, 1
      %p228 = scmp.eq.s32.totalorder %s24, 1
      %p229 = scmp.ne.s32.totalorder %s224, %s226
      %p230 = scmp.eq.s32.totalorder %s24, 0
      %p231 = por %p229, %p230
      %p232 = scmp.ne.s32.totalorder %s224, %s226
      %p233 = scmp.eq.s32.totalorder %s29, 1
      %p234 = por %p232, %p233
      %p235 = scmp.ne.s32.totalorder %s226, %s227
      %p236 = scmp.eq.s32.totalorder %s29, 0
      %p237 = por %p235, %p236
      %p238 = scmp.ne.s32.totalorder %s226, %s227
      %p239 = scmp.eq.s32.totalorder %s30, 1
      %p240 = por %p238, %p239
      %p242 = scmp.ne.s32.totalorder %s227, %s241
      %p243 = scmp.eq.s32.totalorder %s30, 0
      %p244 = por %p242, %p243
      %s245 = ssub.s32 %s31, %s43
      %s246 = ssub.s32 %s32, %s39
      %s247 = sor.u32 %s245, %s246
      %p248 = scmp.eq.s32.totalorder %s247, 0
      %s250 = sadd.s32 %s249, 1
      %s251 = scalar_select %p248, %s249, %s250
      %p254 = pneg %p248
      %p255 = scmp.eq.s32.totalorder %s24, 1
      %p256 = por %p254, %p255
      %p257 = scmp.ne.s32.totalorder %s249, %s252
      %p258 = scmp.eq.s32.totalorder %s24, 0
      %p259 = por %p257, %p258
      %p260 = scmp.ne.s32.totalorder %s249, %s252
      %p261 = scmp.eq.s32.totalorder %s29, 1
      %p262 = por %p260, %p261
      %p263 = scmp.ne.s32.totalorder %s252, %s253
      %p264 = scmp.eq.s32.totalorder %s29, 0
      %p265 = por %p263, %p264
      %p266 = scmp.ne.s32.totalorder %s252, %s253
      %p267 = scmp.eq.s32.totalorder %s30, 1
      %p268 = por %p266, %p267
      %p270 = scmp.ne.s32.totalorder %s253, %s269
      %p271 = scmp.eq.s32.totalorder %s30, 0
      %p272 = por %p270, %p271
      %p273 = scmp.le.s32.totalorder 1, %s24
      %p274 = scmp.lt.s32.totalorder %s24, 3
      %p275 = pnand %p273, %p274
      %p276 = pneg %p275
      // Predicated region
      $region9: #{tpu_custom_call.1} parent=5 // pred_check
        _
      $region10: #{tpu_custom_call.1} parent=5 // pred_check_branch
        %278 = sbr.rel (%p275) target = $region12
      $region11: #{tpu_custom_call.1} parent=5 // pred_region
        %s279 = ssub.s32 %s24, 1
        // Predicated region
        $region13: #{tpu_custom_call.1} parent=11 // pred_check
          %p280 = pneg %p62
        $region14: #{tpu_custom_call.1} parent=11 // pred_check_branch
          %282 = sbr.rel (%p280) target = $region16
        $region15: #{tpu_custom_call.1} parent=11 // pred_region
          %s284 = ssub.s32 128, 128
          %285 = vsyncadd [#allocation3], %s284
          %s286 = smul.addr %s34, 128
          %s287 = scalar_lea.hbm %s0, %s286
          %s289 = sshll.u32 [#allocation2], 4
          %s290 = int_to_ptr.vmem [resolvable:$true] %s289
          %292 = dma.hbm_to_vmem [thread:$0]  %s287, 128, %s290, [#allocation3]
        $region16: #{tpu_custom_call.1} parent=11 // pred_fallthru
          _
        // Predicated region
        $region17: #{tpu_custom_call.1} parent=11 // pred_check
          %p293 = pneg %p111
        $region18: #{tpu_custom_call.1} parent=11 // pred_check_branch
          %295 = sbr.rel (%p293) target = $region20
        $region19: #{tpu_custom_call.1} parent=11 // pred_region
          %s297 = ssub.s32 2048, 2048
          %298 = vsyncadd [#allocation6], %s297
          %s299 = sshll.u32 [#allocation7], 4
          %s300 = int_to_ptr.vmem [resolvable:$true] %s299
          %305 = dma.hbm_to_vmem [thread:$0]  %s2, 2048, %s300, [#allocation6], 128, 128, 8
        $region20: #{tpu_custom_call.1} parent=11 // pred_fallthru
          _
        // Predicated region
        $region21: #{tpu_custom_call.1} parent=11 // pred_check
          %p306 = pneg %p132
        $region22: #{tpu_custom_call.1} parent=11 // pred_check_branch
          %308 = sbr.rel (%p306) target = $region24
        $region23: #{tpu_custom_call.1} parent=11 // pred_region
          %s310 = ssub.s32 2048, 2048
          %311 = vsyncadd [#allocation9], %s310
          %s312 = sshll.u32 [#allocation8], 4
          %s313 = int_to_ptr.vmem [resolvable:$true] %s312
          %318 = dma.hbm_to_vmem [thread:$0]  %s3, 2048, %s313, [#allocation9], 128, 128, 8
        $region24: #{tpu_custom_call.1} parent=11 // pred_fallthru
          _
        // Predicated region
        $region25: #{tpu_custom_call.1} parent=11 // pred_check
          %p319 = pneg %p153
        $region26: #{tpu_custom_call.1} parent=11 // pred_check_branch
          %321 = sbr.rel (%p319) target = $region28
        $region27: #{tpu_custom_call.1} parent=11 // pred_region
          _
        $region28: #{tpu_custom_call.1} parent=11 // pred_fallthru
          _
        // Predicated region
        $region29: #{tpu_custom_call.1} parent=11 // pred_check
          %p322 = pneg %p174
        $region30: #{tpu_custom_call.1} parent=11 // pred_check_branch
          %324 = sbr.rel (%p322) target = $region32
        $region31: #{tpu_custom_call.1} parent=11 // pred_region
          %s326 = ssub.s32 2048, 2048
          %327 = vsyncadd [#allocation9], %s326
          %s328 = sshll.u32 [#allocation10], 4
          %s329 = int_to_ptr.vmem [resolvable:$true] %s328
          %334 = dma.hbm_to_vmem [thread:$0]  %s5, 2048, %s329, [#allocation9], 128, 128, 8
        $region32: #{tpu_custom_call.1} parent=11 // pred_fallthru
          _
        // Predicated region
        $region33: #{tpu_custom_call.1} parent=11 // pred_check
          %p335 = pneg %p195
        $region34: #{tpu_custom_call.1} parent=11 // pred_check_branch
          %337 = sbr.rel (%p335) target = $region36
        $region35: #{tpu_custom_call.1} parent=11 // pred_region
          _
        $region36: #{tpu_custom_call.1} parent=11 // pred_fallthru
          _
        // Predicated region
        $region37: #{tpu_custom_call.1} parent=11 // pred_check
          %p338 = pneg %p216
        $region38: #{tpu_custom_call.1} parent=11 // pred_check_branch
          %340 = sbr.rel (%p338) target = $region40
        $region39: #{tpu_custom_call.1} parent=11 // pred_region
          %s342 = ssub.s32 2048, 2048
          %343 = vsyncadd [#allocation12], %s342
          %s344 = sshll.u32 [#allocation11], 4
          %s345 = int_to_ptr.vmem [resolvable:$true] %s344
          %350 = dma.hbm_to_vmem [thread:$0]  %s7, 2048, %s345, [#allocation12], 128, 128, 8
        $region40: #{tpu_custom_call.1} parent=11 // pred_fallthru
          _
        // Predicated region
        $region41: #{tpu_custom_call.1} parent=11 // pred_check
          %p351 = pneg %p237
        $region42: #{tpu_custom_call.1} parent=11 // pred_check_branch
          %353 = sbr.rel (%p351) target = $region44
        $region43: #{tpu_custom_call.1} parent=11 // pred_region
          _
        $region44: #{tpu_custom_call.1} parent=11 // pred_fallthru
          _
      $region12: #{tpu_custom_call.1} parent=5 // pred_fallthru
        _
      %p354 = scmp.lt.s32.totalorder %s24, 2
      // Predicated region
      $region45: #{tpu_custom_call.1} parent=5 // pred_check
        %p355 = pneg %p354
      $region46: #{tpu_custom_call.1} parent=5 // pred_check_branch
        %357 = sbr.rel (%p355) target = $region48
      $region47: #{tpu_custom_call.1} parent=5 // pred_region
        // Predicated region
        $region49: #{tpu_custom_call.1} parent=47 // pred_check
          %p358 = pneg %p84
        $region50: #{tpu_custom_call.1} parent=47 // pred_check_branch
          %360 = sbr.rel (%p358) target = $region52
        $region51: #{tpu_custom_call.1} parent=47 // pred_region
          %s361 = sand.u32 %s24, 1
          %s362 = scalar_lea.sflag [#allocation6], %s361
          %s363 = sand.u32 %s74, 1
          %s364 = smul.addr %s363, 8
          %s365 = scalar_lea.vmem [#allocation5], %s364
          %s367 = ssub.s32 128, 128
          %368 = vsyncadd %s362, %s367
          %s369 = sadd.s32 %s32, %s31
          %s370 = smul.addr %s369, 128
          %s371 = scalar_lea.hbm %s1, %s370
          %s373 = sshll.u32 %s365, 4
          %s374 = int_to_ptr.vmem [resolvable:$true] %s373
          %376 = dma.hbm_to_vmem [thread:$0]  %s371, 128, %s374, %s362
        $region52: #{tpu_custom_call.1} parent=47 // pred_fallthru
          _
      $region48: #{tpu_custom_call.1} parent=5 // pred_fallthru
        _
      %p377 = scmp.le.s32.totalorder 1, %s24
      %p378 = scmp.lt.s32.totalorder %s24, 3
      %p379 = pnand %p377, %p378
      %p380 = pneg %p379
      // Predicated region
      $region53: #{tpu_custom_call.1} parent=5 // pred_check
        _
      $region54: #{tpu_custom_call.1} parent=5 // pred_check_branch
        %382 = sbr.rel (%p379) target = $region56
      $region55: #{tpu_custom_call.1} parent=5 // pred_region
        %s383 = ssub.s32 %s24, 1
        // Predicated region
        $region57: #{tpu_custom_call.1} parent=55 // pred_check
          %p384 = pneg %p62
        $region58: #{tpu_custom_call.1} parent=55 // pred_check_branch
          %386 = sbr.rel (%p384) target = $region60
        $region59: #{tpu_custom_call.1} parent=55 // pred_region
          %387 = dma.done [#allocation3], 128
        $region60: #{tpu_custom_call.1} parent=55 // pred_fallthru
          _
        %s388 = sand.u32 %s29, 1
        %s389 = scalar_lea.sflag [#allocation6], %s388
        %s390 = sand.u32 %s77, 1
        %s391 = smul.addr %s390, 8
        %s392 = scalar_lea.vmem [#allocation5], %s391
        // Predicated region
        $region61: #{tpu_custom_call.1} parent=55 // pred_check
          %p393 = pneg %p90
        $region62: #{tpu_custom_call.1} parent=55 // pred_check_branch
          %395 = sbr.rel (%p393) target = $region64
        $region63: #{tpu_custom_call.1} parent=55 // pred_region
          %396 = dma.done %s389, 128
        $region64: #{tpu_custom_call.1} parent=55 // pred_fallthru
          _
        // Predicated region
        $region65: #{tpu_custom_call.1} parent=55 // pred_check
          %p397 = pneg %p111
        $region66: #{tpu_custom_call.1} parent=55 // pred_check_branch
          %399 = sbr.rel (%p397) target = $region68
        $region67: #{tpu_custom_call.1} parent=55 // pred_region
          %400 = dma.done [#allocation6], 2048
        $region68: #{tpu_custom_call.1} parent=55 // pred_fallthru
          _
        // Predicated region
        $region69: #{tpu_custom_call.1} parent=55 // pred_check
          %p401 = pneg %p132
        $region70: #{tpu_custom_call.1} parent=55 // pred_check_branch
          %403 = sbr.rel (%p401) target = $region72
        $region71: #{tpu_custom_call.1} parent=55 // pred_region
          %404 = dma.done [#allocation9], 2048
        $region72: #{tpu_custom_call.1} parent=55 // pred_fallthru
          _
        // Predicated region
        $region73: #{tpu_custom_call.1} parent=55 // pred_check
          %p405 = pneg %p174
        $region74: #{tpu_custom_call.1} parent=55 // pred_check_branch
          %407 = sbr.rel (%p405) target = $region76
        $region75: #{tpu_custom_call.1} parent=55 // pred_region
          %408 = dma.done [#allocation9], 2048
        $region76: #{tpu_custom_call.1} parent=55 // pred_fallthru
          _
        // Predicated region
        $region77: #{tpu_custom_call.1} parent=55 // pred_check
          %p409 = pneg %p216
        $region78: #{tpu_custom_call.1} parent=55 // pred_check_branch
          %411 = sbr.rel (%p409) target = $region80
        $region79: #{tpu_custom_call.1} parent=55 // pred_region
          %412 = dma.done [#allocation12], 2048
        $region80: #{tpu_custom_call.1} parent=55 // pred_fallthru
          _
        %p413 = pneg %p62
        %p414 = pneg %p59
        %s415 = sand.u32 %s29, 1
        %s416 = scalar_lea.sflag [#allocation6], %s415
        %s417 = sand.u32 %s77, 1
        %s418 = smul.addr %s417, 8
        %s419 = scalar_lea.vmem [#allocation5], %s418
        %p420 = pneg %p90
        %p421 = pneg %p87
        %p422 = pneg %p111
        %p423 = pneg %p108
        %p424 = pneg %p132
        %p425 = pneg %p129
        %p426 = pneg %p153
        %p427 = pneg %p150
        %p428 = pneg %p174
        %p429 = pneg %p171
        %p430 = pneg %p195
        %p431 = pneg %p192
        %p432 = pneg %p216
        %p433 = pneg %p213
        %p434 = pneg %p237
        %p435 = pneg %p234
        %p436 = pneg %p265
        %p437 = pneg %p262
        %s438 = sand.u32 %s252, 1
        %s439 = scalar_lea.sflag [#allocation4], %s438
        %s440 = sand.u32 %s252, 1
        %s441 = smul.addr %s440, 8
        %s442 = scalar_lea.vmem [#allocation13], %s441
        %v443 = vld [vmem:[#allocation2] sm:$0xff]
        %v444 = vld [vmem:[%s392] sm:$0xff]
        %v445 = vld [vmem:[#allocation7] sm:$0xff]
        %v446 = vld [vmem:[#allocation7 + $0x8] sm:$0xff]
        %v447 = vld [vmem:[#allocation7 + $0x10] sm:$0xff]
        %v448 = vld [vmem:[#allocation7 + $0x18] sm:$0xff]
        %v449 = vld [vmem:[#allocation7 + $0x20] sm:$0xff]
        %v450 = vld [vmem:[#allocation7 + $0x28] sm:$0xff]
        %v451 = vld [vmem:[#allocation7 + $0x30] sm:$0xff]
        %v452 = vld [vmem:[#allocation7 + $0x38] sm:$0xff]
        %v453 = vld [vmem:[#allocation7 + $0x40] sm:$0xff]
        %v454 = vld [vmem:[#allocation7 + $0x48] sm:$0xff]
        %v455 = vld [vmem:[#allocation7 + $0x50] sm:$0xff]
        %v456 = vld [vmem:[#allocation7 + $0x58] sm:$0xff]
        %v457 = vld [vmem:[#allocation7 + $0x60] sm:$0xff]
        %v458 = vld [vmem:[#allocation7 + $0x68] sm:$0xff]
        %v459 = vld [vmem:[#allocation7 + $0x70] sm:$0xff]
        %v460 = vld [vmem:[#allocation7 + $0x78] sm:$0xff]
        %v461 = vld [vmem:[#allocation8] sm:$0xff]
        %v462 = vld [vmem:[#allocation8 + $0x8] sm:$0xff]
        %v463 = vld [vmem:[#allocation8 + $0x10] sm:$0xff]
        %v464 = vld [vmem:[#allocation8 + $0x18] sm:$0xff]
        %v465 = vld [vmem:[#allocation8 + $0x20] sm:$0xff]
        %v466 = vld [vmem:[#allocation8 + $0x28] sm:$0xff]
        %v467 = vld [vmem:[#allocation8 + $0x30] sm:$0xff]
        %v468 = vld [vmem:[#allocation8 + $0x38] sm:$0xff]
        %v469 = vld [vmem:[#allocation8 + $0x40] sm:$0xff]
        %v470 = vld [vmem:[#allocation8 + $0x48] sm:$0xff]
        %v471 = vld [vmem:[#allocation8 + $0x50] sm:$0xff]
        %v472 = vld [vmem:[#allocation8 + $0x58] sm:$0xff]
        %v473 = vld [vmem:[#allocation8 + $0x60] sm:$0xff]
        %v474 = vld [vmem:[#allocation8 + $0x68] sm:$0xff]
        %v475 = vld [vmem:[#allocation8 + $0x70] sm:$0xff]
        %v476 = vld [vmem:[#allocation8 + $0x78] sm:$0xff]
        %477 = vmatprep.subr.mxu0 0.0
        %478 = vmatpush1.msra.mxu0 %v476
        %479 = vmatprep.subr.mxu0 0.0
        %480 = vmatpush1.msra.mxu0 %v475
        %481 = vmatprep.subr.mxu0 0.0
        %482 = vmatpush1.msra.mxu0 %v474
        %483 = vmatprep.subr.mxu0 0.0
        %484 = vmatpush1.msra.mxu0 %v473
        %485 = vmatprep.subr.mxu0 0.0
        %486 = vmatpush1.msra.mxu0 %v472
        %487 = vmatprep.subr.mxu0 0.0
        %488 = vmatpush1.msra.mxu0 %v471
        %489 = vmatprep.subr.mxu0 0.0
        %490 = vmatpush1.msra.mxu0 %v470
        %491 = vmatprep.subr.mxu0 0.0
        %492 = vmatpush1.msra.mxu0 %v469
        %493 = vmatprep.subr.mxu0 0.0
        %494 = vmatpush1.msra.mxu0 %v468
        %495 = vmatprep.subr.mxu0 0.0
        %496 = vmatpush1.msra.mxu0 %v467
        %497 = vmatprep.subr.mxu0 0.0
        %498 = vmatpush1.msra.mxu0 %v466
        %499 = vmatprep.subr.mxu0 0.0
        %500 = vmatpush1.msra.mxu0 %v465
        %501 = vmatprep.subr.mxu0 0.0
        %502 = vmatpush1.msra.mxu0 %v464
        %503 = vmatprep.subr.mxu0 0.0
        %504 = vmatpush1.msra.mxu0 %v463
        %505 = vmatprep.subr.mxu0 0.0
        %506 = vmatpush1.msra.mxu0 %v462
        %507 = vmatprep.subr.mxu0 0.0
        %508 = vmatpush1.msra.mxu0 %v461
        %509 = vmatprep.subr.mxu0 0.0
        %510 = vmatpush2.msra.mxu0 0.0
        %511 = vmatprep.subr.mxu0 0.0
        %512 = vmatpush2.msra.mxu0 0.0
        %513 = vmatprep.subr.mxu0 0.0
        %514 = vmatpush2.msra.mxu0 0.0
        %515 = vmatprep.subr.mxu0 0.0
        %516 = vmatpush2.msra.mxu0 0.0
        %517 = vmatprep.subr.mxu0 0.0
        %518 = vmatpush2.msra.mxu0 0.0
        %519 = vmatprep.subr.mxu0 0.0
        %520 = vmatpush2.msra.mxu0 0.0
        %521 = vmatprep.subr.mxu0 0.0
        %522 = vmatpush2.msra.mxu0 0.0
        %523 = vmatprep.subr.mxu0 0.0
        %524 = vmatpush2.msra.mxu0 0.0
        %525 = vmatprep.subr.mxu0 0.0
        %526 = vmatpush2.msra.mxu0 0.0
        %527 = vmatprep.subr.mxu0 0.0
        %528 = vmatpush2.msra.mxu0 0.0
        %529 = vmatprep.subr.mxu0 0.0
        %530 = vmatpush2.msra.mxu0 0.0
        %531 = vmatprep.subr.mxu0 0.0
        %532 = vmatpush2.msra.mxu0 0.0
        %533 = vmatprep.subr.mxu0 0.0
        %534 = vmatpush2.msra.mxu0 0.0
        %535 = vmatprep.subr.mxu0 0.0
        %536 = vmatpush2.msra.mxu0 0.0
        %537 = vmatprep.subr.mxu0 0.0
        %538 = vmatpush2.msra.mxu0 0.0
        %539 = vmatprep.subr.mxu0 0.0
        %540 = vmatpush2.msra.mxu0 0.0
        %541 = vmatprep.mubr.f32.mxu0 0.0
        %542 = vmatmul.mubr.f32.gmra.mxu0 %v444
        %v543 = vpop.f32.mrf.mxu0
        %v544 = vadd.f32 0.0, %v543
        %v545 = vpop.f32.mrf.mxu0
        %546 = vdwg.mxu0
        %547 = vmatprep.subr.mxu0 0.0
        %548 = vmatpush1.msra.mxu0 %v460
        %549 = vmatprep.subr.mxu0 0.0
        %550 = vmatpush1.msra.mxu0 %v459
        %551 = vmatprep.subr.mxu0 0.0
        %552 = vmatpush1.msra.mxu0 %v458
        %553 = vmatprep.subr.mxu0 0.0
        %554 = vmatpush1.msra.mxu0 %v457
        %555 = vmatprep.subr.mxu0 0.0
        %556 = vmatpush1.msra.mxu0 %v456
        %557 = vmatprep.subr.mxu0 0.0
        %558 = vmatpush1.msra.mxu0 %v455
        %559 = vmatprep.subr.mxu0 0.0
        %560 = vmatpush1.msra.mxu0 %v454
        %561 = vmatprep.subr.mxu0 0.0
        %562 = vmatpush1.msra.mxu0 %v453
        %563 = vmatprep.subr.mxu0 0.0
        %564 = vmatpush1.msra.mxu0 %v452
        %565 = vmatprep.subr.mxu0 0.0
        %566 = vmatpush1.msra.mxu0 %v451
        %567 = vmatprep.subr.mxu0 0.0
        %568 = vmatpush1.msra.mxu0 %v450
        %569 = vmatprep.subr.mxu0 0.0
        %570 = vmatpush1.msra.mxu0 %v449
        %571 = vmatprep.subr.mxu0 0.0
        %572 = vmatpush1.msra.mxu0 %v448
        %573 = vmatprep.subr.mxu0 0.0
        %574 = vmatpush1.msra.mxu0 %v447
        %575 = vmatprep.subr.mxu0 0.0
        %576 = vmatpush1.msra.mxu0 %v446
        %577 = vmatprep.subr.mxu0 0.0
        %578 = vmatpush1.msra.mxu0 %v445
        %579 = vmatprep.subr.mxu0 0.0
        %580 = vmatpush2.msra.mxu0 0.0
        %581 = vmatprep.subr.mxu0 0.0
        %582 = vmatpush2.msra.mxu0 0.0
        %583 = vmatprep.subr.mxu0 0.0
        %584 = vmatpush2.msra.mxu0 0.0
        %585 = vmatprep.subr.mxu0 0.0
        %586 = vmatpush2.msra.mxu0 0.0
        %587 = vmatprep.subr.mxu0 0.0
        %588 = vmatpush2.msra.mxu0 0.0
        %589 = vmatprep.subr.mxu0 0.0
        %590 = vmatpush2.msra.mxu0 0.0
        %591 = vmatprep.subr.mxu0 0.0
        %592 = vmatpush2.msra.mxu0 0.0
        %593 = vmatprep.subr.mxu0 0.0
        %594 = vmatpush2.msra.mxu0 0.0
        %595 = vmatprep.subr.mxu0 0.0
        %596 = vmatpush2.msra.mxu0 0.0
        %597 = vmatprep.subr.mxu0 0.0
        %598 = vmatpush2.msra.mxu0 0.0
        %599 = vmatprep.subr.mxu0 0.0
        %600 = vmatpush2.msra.mxu0 0.0
        %601 = vmatprep.subr.mxu0 0.0
        %602 = vmatpush2.msra.mxu0 0.0
        %603 = vmatprep.subr.mxu0 0.0
        %604 = vmatpush2.msra.mxu0 0.0
        %605 = vmatprep.subr.mxu0 0.0
        %606 = vmatpush2.msra.mxu0 0.0
        %607 = vmatprep.subr.mxu0 0.0
        %608 = vmatpush2.msra.mxu0 0.0
        %609 = vmatprep.subr.mxu0 0.0
        %610 = vmatpush2.msra.mxu0 0.0
        %611 = vmatprep.mubr.f32.mxu0 0.0
        %612 = vmatmul.mubr.f32.gmra.mxu0 %v443
        %v613 = vpop.f32.mrf.mxu0
        %v614 = vadd.f32 %v544, %v613
        %v615 = vpop.f32.mrf.mxu0
        %616 = vdwg.mxu0
        %v617 = vld [vmem:[%s4] sm:$0x1]
        %v619 = vlaneseq
        %v620 = vshrl.u32 %v619, 7
        %v621 = vsub.s32 0, %v620
        %v622 = vrot.slane %v617, %v621
        %v624 = vadd.f32 %v614, %v622
        %v625 = vmax.f32 %v624, 0.0
        %v626 = vld [vmem:[#allocation10] sm:$0xff]
        %v627 = vld [vmem:[#allocation10 + $0x8] sm:$0xff]
        %v628 = vld [vmem:[#allocation10 + $0x10] sm:$0xff]
        %v629 = vld [vmem:[#allocation10 + $0x18] sm:$0xff]
        %v630 = vld [vmem:[#allocation10 + $0x20] sm:$0xff]
        %v631 = vld [vmem:[#allocation10 + $0x28] sm:$0xff]
        %v632 = vld [vmem:[#allocation10 + $0x30] sm:$0xff]
        %v633 = vld [vmem:[#allocation10 + $0x38] sm:$0xff]
        %v634 = vld [vmem:[#allocation10 + $0x40] sm:$0xff]
        %v635 = vld [vmem:[#allocation10 + $0x48] sm:$0xff]
        %v636 = vld [vmem:[#allocation10 + $0x50] sm:$0xff]
        %v637 = vld [vmem:[#allocation10 + $0x58] sm:$0xff]
        %v638 = vld [vmem:[#allocation10 + $0x60] sm:$0xff]
        %v639 = vld [vmem:[#allocation10 + $0x68] sm:$0xff]
        %v640 = vld [vmem:[#allocation10 + $0x70] sm:$0xff]
        %v641 = vld [vmem:[#allocation10 + $0x78] sm:$0xff]
        %v642 = vld [vmem:[%s6] sm:$0x1]
        %v644 = vlaneseq
        %v645 = vshrl.u32 %v644, 7
        %v646 = vsub.s32 0, %v645
        %v647 = vrot.slane %v642, %v646
        %649 = vmatprep.subr.mxu0 0.0
        %650 = vmatpush1.msra.mxu0 %v641
        %651 = vmatprep.subr.mxu0 0.0
        %652 = vmatpush1.msra.mxu0 %v640
        %653 = vmatprep.subr.mxu0 0.0
        %654 = vmatpush1.msra.mxu0 %v639
        %655 = vmatprep.subr.mxu0 0.0
        %656 = vmatpush1.msra.mxu0 %v638
        %657 = vmatprep.subr.mxu0 0.0
        %658 = vmatpush1.msra.mxu0 %v637
        %659 = vmatprep.subr.mxu0 0.0
        %660 = vmatpush1.msra.mxu0 %v636
        %661 = vmatprep.subr.mxu0 0.0
        %662 = vmatpush1.msra.mxu0 %v635
        %663 = vmatprep.subr.mxu0 0.0
        %664 = vmatpush1.msra.mxu0 %v634
        %665 = vmatprep.subr.mxu0 0.0
        %666 = vmatpush1.msra.mxu0 %v633
        %667 = vmatprep.subr.mxu0 0.0
        %668 = vmatpush1.msra.mxu0 %v632
        %669 = vmatprep.subr.mxu0 0.0
        %670 = vmatpush1.msra.mxu0 %v631
        %671 = vmatprep.subr.mxu0 0.0
        %672 = vmatpush1.msra.mxu0 %v630
        %673 = vmatprep.subr.mxu0 0.0
        %674 = vmatpush1.msra.mxu0 %v629
        %675 = vmatprep.subr.mxu0 0.0
        %676 = vmatpush1.msra.mxu0 %v628
        %677 = vmatprep.subr.mxu0 0.0
        %678 = vmatpush1.msra.mxu0 %v627
        %679 = vmatprep.subr.mxu0 0.0
        %680 = vmatpush1.msra.mxu0 %v626
        %681 = vmatprep.subr.mxu0 0.0
        %682 = vmatpush2.msra.mxu0 0.0
        %683 = vmatprep.subr.mxu0 0.0
        %684 = vmatpush2.msra.mxu0 0.0
        %685 = vmatprep.subr.mxu0 0.0
        %686 = vmatpush2.msra.mxu0 0.0
        %687 = vmatprep.subr.mxu0 0.0
        %688 = vmatpush2.msra.mxu0 0.0
        %689 = vmatprep.subr.mxu0 0.0
        %690 = vmatpush2.msra.mxu0 0.0
        %691 = vmatprep.subr.mxu0 0.0
        %692 = vmatpush2.msra.mxu0 0.0
        %693 = vmatprep.subr.mxu0 0.0
        %694 = vmatpush2.msra.mxu0 0.0
        %695 = vmatprep.subr.mxu0 0.0
        %696 = vmatpush2.msra.mxu0 0.0
        %697 = vmatprep.subr.mxu0 0.0
        %698 = vmatpush2.msra.mxu0 0.0
        %699 = vmatprep.subr.mxu0 0.0
        %700 = vmatpush2.msra.mxu0 0.0
        %701 = vmatprep.subr.mxu0 0.0
        %702 = vmatpush2.msra.mxu0 0.0
        %703 = vmatprep.subr.mxu0 0.0
        %704 = vmatpush2.msra.mxu0 0.0
        %705 = vmatprep.subr.mxu0 0.0
        %706 = vmatpush2.msra.mxu0 0.0
        %707 = vmatprep.subr.mxu0 0.0
        %708 = vmatpush2.msra.mxu0 0.0
        %709 = vmatprep.subr.mxu0 0.0
        %710 = vmatpush2.msra.mxu0 0.0
        %711 = vmatprep.subr.mxu0 0.0
        %712 = vmatpush2.msra.mxu0 0.0
        %713 = vmatprep.mubr.f32.mxu0 0.0
        %714 = vmatmul.mubr.f32.gmra.mxu0 %v625
        %v715 = vpop.f32.mrf.mxu0
        %v716 = vadd.f32 %v647, %v715
        %v717 = vpop.f32.mrf.mxu0
        %718 = vdwg.mxu0
        %v719 = vmax.f32 %v716, 0.0
        %v720 = vld [vmem:[#allocation11] sm:$0xff]
        %v721 = vld [vmem:[#allocation11 + $0x8] sm:$0xff]
        %v722 = vld [vmem:[#allocation11 + $0x10] sm:$0xff]
        %v723 = vld [vmem:[#allocation11 + $0x18] sm:$0xff]
        %v724 = vld [vmem:[#allocation11 + $0x20] sm:$0xff]
        %v725 = vld [vmem:[#allocation11 + $0x28] sm:$0xff]
        %v726 = vld [vmem:[#allocation11 + $0x30] sm:$0xff]
        %v727 = vld [vmem:[#allocation11 + $0x38] sm:$0xff]
        %v728 = vld [vmem:[#allocation11 + $0x40] sm:$0xff]
        %v729 = vld [vmem:[#allocation11 + $0x48] sm:$0xff]
        %v730 = vld [vmem:[#allocation11 + $0x50] sm:$0xff]
        %v731 = vld [vmem:[#allocation11 + $0x58] sm:$0xff]
        %v732 = vld [vmem:[#allocation11 + $0x60] sm:$0xff]
        %v733 = vld [vmem:[#allocation11 + $0x68] sm:$0xff]
        %v734 = vld [vmem:[#allocation11 + $0x70] sm:$0xff]
        %v735 = vld [vmem:[#allocation11 + $0x78] sm:$0xff]
        %v736 = vld [vmem:[%s8] sm:$0x1]
        %v738 = vlaneseq
        %v739 = vshrl.u32 %v738, 7
        %v740 = vsub.s32 0, %v739
        %v741 = vrot.slane %v736, %v740
        %743 = vmatprep.subr.mxu0 0.0
        %744 = vmatpush1.msra.mxu0 %v735
        %745 = vmatprep.subr.mxu0 0.0
        %746 = vmatpush1.msra.mxu0 %v734
        %747 = vmatprep.subr.mxu0 0.0
        %748 = vmatpush1.msra.mxu0 %v733
        %749 = vmatprep.subr.mxu0 0.0
        %750 = vmatpush1.msra.mxu0 %v732
        %751 = vmatprep.subr.mxu0 0.0
        %752 = vmatpush1.msra.mxu0 %v731
        %753 = vmatprep.subr.mxu0 0.0
        %754 = vmatpush1.msra.mxu0 %v730
        %755 = vmatprep.subr.mxu0 0.0
        %756 = vmatpush1.msra.mxu0 %v729
        %757 = vmatprep.subr.mxu0 0.0
        %758 = vmatpush1.msra.mxu0 %v728
        %759 = vmatprep.subr.mxu0 0.0
        %760 = vmatpush1.msra.mxu0 %v727
        %761 = vmatprep.subr.mxu0 0.0
        %762 = vmatpush1.msra.mxu0 %v726
        %763 = vmatprep.subr.mxu0 0.0
        %764 = vmatpush1.msra.mxu0 %v725
        %765 = vmatprep.subr.mxu0 0.0
        %766 = vmatpush1.msra.mxu0 %v724
        %767 = vmatprep.subr.mxu0 0.0
        %768 = vmatpush1.msra.mxu0 %v723
        %769 = vmatprep.subr.mxu0 0.0
        %770 = vmatpush1.msra.mxu0 %v722
        %771 = vmatprep.subr.mxu0 0.0
        %772 = vmatpush1.msra.mxu0 %v721
        %773 = vmatprep.subr.mxu0 0.0
        %774 = vmatpush1.msra.mxu0 %v720
        %775 = vmatprep.subr.mxu0 0.0
        %776 = vmatpush2.msra.mxu0 0.0
        %777 = vmatprep.subr.mxu0 0.0
        %778 = vmatpush2.msra.mxu0 0.0
        %779 = vmatprep.subr.mxu0 0.0
        %780 = vmatpush2.msra.mxu0 0.0
        %781 = vmatprep.subr.mxu0 0.0
        %782 = vmatpush2.msra.mxu0 0.0
        %783 = vmatprep.subr.mxu0 0.0
        %784 = vmatpush2.msra.mxu0 0.0
        %785 = vmatprep.subr.mxu0 0.0
        %786 = vmatpush2.msra.mxu0 0.0
        %787 = vmatprep.subr.mxu0 0.0
        %788 = vmatpush2.msra.mxu0 0.0
        %789 = vmatprep.subr.mxu0 0.0
        %790 = vmatpush2.msra.mxu0 0.0
        %791 = vmatprep.subr.mxu0 0.0
        %792 = vmatpush2.msra.mxu0 0.0
        %793 = vmatprep.subr.mxu0 0.0
        %794 = vmatpush2.msra.mxu0 0.0
        %795 = vmatprep.subr.mxu0 0.0
        %796 = vmatpush2.msra.mxu0 0.0
        %797 = vmatprep.subr.mxu0 0.0
        %798 = vmatpush2.msra.mxu0 0.0
        %799 = vmatprep.subr.mxu0 0.0
        %800 = vmatpush2.msra.mxu0 0.0
        %801 = vmatprep.subr.mxu0 0.0
        %802 = vmatpush2.msra.mxu0 0.0
        %803 = vmatprep.subr.mxu0 0.0
        %804 = vmatpush2.msra.mxu0 0.0
        %805 = vmatprep.subr.mxu0 0.0
        %806 = vmatpush2.msra.mxu0 0.0
        %807 = vmatprep.mubr.f32.mxu0 0.0
        %808 = vmatmul.mubr.f32.gmra.mxu0 %v719
        %v809 = vpop.f32.mrf.mxu0
        %v810 = vadd.f32 %v741, %v809
        %v811 = vpop.f32.mrf.mxu0
        %812 = vdwg.mxu0
        %v813 = vadd.f32 %v810, 1.0
        %v814 = vmax.f32 %v813, 0.05
        %v815 = vmin.f32 %v814, 1e+09
        %816 = vst [vmem:[%s442] sm:$0xff] %v815
        %s817 = sand.u32 %s252, 1
        %s818 = scalar_lea.sflag [#allocation4], %s817
        %s819 = sand.u32 %s252, 1
        %s820 = smul.addr %s819, 8
        %s821 = scalar_lea.vmem [#allocation13], %s820
        // Predicated region
        $region81: #{tpu_custom_call.1} parent=55 // pred_check
          %p822 = pneg %p262
        $region82: #{tpu_custom_call.1} parent=55 // pred_check_branch
          %824 = sbr.rel (%p822) target = $region84
        $region83: #{tpu_custom_call.1} parent=55 // pred_region
          %s826 = ssub.s32 128, 128
          %827 = vsyncadd %s818, %s826
          %s828 = sadd.s32 %s34, %s33
          %s829 = smul.addr %s828, 128
          %s830 = scalar_lea.hbm %s9, %s829
          %s832 = sshll.u32 %s821, 4
          %s833 = int_to_ptr.vmem [resolvable:$true] %s832
          %835 = dma.vmem_to_hbm [thread:$0]  %s833, 128, %s830, %s818
        $region84: #{tpu_custom_call.1} parent=55 // pred_fallthru
          _
      $region56: #{tpu_custom_call.1} parent=5 // pred_fallthru
        _
      %p836 = scmp.le.s32.totalorder 2, %s24
      // Predicated region
      $region85: #{tpu_custom_call.1} parent=5 // pred_check
        %p837 = pneg %p836
      $region86: #{tpu_custom_call.1} parent=5 // pred_check_branch
        %839 = sbr.rel (%p837) target = $region88
      $region87: #{tpu_custom_call.1} parent=5 // pred_region
        %s840 = ssub.s32 %s24, 2
        // Predicated region
        $region89: #{tpu_custom_call.1} parent=87 // pred_check
          %p841 = pneg %p268
        $region90: #{tpu_custom_call.1} parent=87 // pred_check_branch
          %843 = sbr.rel (%p841) target = $region92
        $region91: #{tpu_custom_call.1} parent=87 // pred_region
          %s844 = sand.u32 %s253, 1
          %s845 = scalar_lea.sflag [#allocation4], %s844
          %s846 = sand.u32 %s253, 1
          %s847 = smul.addr %s846, 8
          %s848 = scalar_lea.vmem [#allocation13], %s847
          %849 = dma.done %s845, 128
        $region92: #{tpu_custom_call.1} parent=87 // pred_fallthru
          _
      $region88: #{tpu_custom_call.1} parent=5 // pred_fallthru
        _
    $region6: #{tpu_custom_call.1} parent=1 // loop_footer
      %s28 = sadd.s32 1, %s24
    $region7: #{tpu_custom_call.1} parent=1 // loop_footer_branch
      %23 = sbr.rel target = $region3
    $region8: #{tpu_custom_call.1} parent=1 // loop_exit
      _
    %850 = vsyncpa [#allocation3], 1
    %s851 = scalar_lea.sflag [#allocation3], 1
    %852 = vsyncpa %s851, 1
    %853 = vsyncpa [#allocation6], 1
    %s854 = scalar_lea.sflag [#allocation6], 1
    %855 = vsyncpa %s854, 1
    %856 = vsyncpa [#allocation9], 1
    %857 = vsyncpa [#allocation12], 1
    %858 = vsyncpa [#allocation4], 1
    %s859 = scalar_lea.sflag [#allocation4], 1
    %860 = vsyncpa %s859, 1

</llo_original>
